<compile_context>
chip_gen: v5e
topology: v5e:2x2
jax: 0.10.0
libtpu: 0.0.40
codegen_flags: <defaults>
</compile_context>

<pallas_src>
import functools
import math

import jax
import jax.numpy as jnp
from jax import lax
from jax.experimental import pallas as pl
from jax.experimental.pallas import tpu as pltpu

EPS = float(jnp.finfo(jnp.float32).eps)   # torch.nn.RMSNorm default eps in f32
NEG_INF = -1e30


def _vmem_limit_bytes():
    try:
        cap = int(getattr(pltpu.get_tpu_info(), "vmem_capacity_bytes",
                          64 * 1024 * 1024))
    except Exception:
        cap = 64 * 1024 * 1024
    # ~96 MiB on 128 MiB parts (v5e/v6e), ~48 MiB on 64 MiB parts (v7x)
    return int(min(cap * 3 // 4, 100 * 1024 * 1024))


VMEM_LIMIT = _vmem_limit_bytes()


def _round_up(x, m):
    return ((x + m - 1) // m) * m


def _seq_tile(L):
    """Row tile for attention / FFN / lm_head kernels."""
    return min(256, _round_up(L, 8))


def _divisor_tile(total, cap):
    """Largest divisor of `total` <= cap that is a multiple of 8 (or == total)."""
    for c in range(min(cap, total), 0, -1):
        if total % c == 0 and (c % 8 == 0 or c == total):
            return c
    return total


def _mamba_chunk(tl, d_state, d_inner):
    # ~8 live f32 slabs of (chunk, d_state*d_inner) during the log-depth scan;
    # keep them within ~1/3 of the VMEM budget.
    cap = max(8, (VMEM_LIMIT // 3) // (8 * 4 * d_state * d_inner))
    return _divisor_tile(tl, min(cap, 128))


def _ff_tile(d_ff):
    if d_ff <= 1024:
        return d_ff
    for c in range(1024, 127, -128):
        if d_ff % c == 0:
            return c
    return d_ff


def _vocab_tile(V):
    if V <= 2048:
        return V
    for c in range(2048, 127, -128):
        if V % c == 0:
            return c
    return V


# ---------------------------------------------------------------------------
# small in-kernel helpers
# ---------------------------------------------------------------------------
def _rmsnorm(x, w):
    ms = jnp.mean(x * x, axis=-1, keepdims=True)
    return x * lax.rsqrt(ms + EPS) * w


def _silu(x):
    return x * jax.nn.sigmoid(x)


def _softplus(x):
    # matches torch.nn.functional.softplus (threshold 20)
    return jnp.where(x > 20.0, x, jnp.log1p(jnp.exp(jnp.minimum(x, 20.0))))


# ---------------------------------------------------------------------------
# Mamba block:  out = x + SelectiveScanSSM(RMSNorm(x))
# grid = (B, L/chunk); h state and conv tail carried in VMEM across chunks.
# ---------------------------------------------------------------------------
def _mamba_kernel(x_ref, wn_ref, win_ref, wconv_ref, bconv_ref, wpd_ref,
                  bdt_ref, alog_ref, dpar_ref, wout_ref, o_ref,
                  h_carry, conv_tail,
                  *, chunk, d_inner, d_state, d_conv):
    ci = pl.program_id(1)
    N = d_state * d_inner

    @pl.when(ci == 0)
    def _():
        h_carry[...] = jnp.zeros_like(h_carry)
        conv_tail[...] = jnp.zeros_like(conv_tail)

    xb = x_ref[0].astype(jnp.float32)                        # (chunk, D)
    xn = _rmsnorm(xb, wn_ref[...])

    xr = jnp.dot(xn.astype(jnp.bfloat16), win_ref[...],
                 preferred_element_type=jnp.float32)         # (chunk, 2*d_inner)
    xi = xr[:, :d_inner]
    res = xr[:, d_inner:]

    # depthwise causal conv1d; tail of the previous chunk carried in scratch
    xpad = jnp.concatenate([conv_tail[...], xi], axis=0)     # (chunk+d_conv-1, di)
    conv = jnp.zeros((chunk, d_inner), jnp.float32)
    for k in range(d_conv):                                  # tiny static loop
        conv = conv + wconv_ref[k:k + 1, :] * xpad[k:k + chunk, :]
    conv_tail[...] = xpad[chunk:, :]
    xc = _silu(conv + bconv_ref[...])                        # (chunk, d_inner)

    # fused [dt_proj | x_proj B-columns] matmul (one MXU call)
    xpd = jnp.dot(xc.astype(jnp.bfloat16), wpd_ref[...],
                  preferred_element_type=jnp.float32)        # (chunk, di+ds)
    delta = _softplus(xpd[:, :d_inner] + bdt_ref[...])       # (chunk, d_inner)
    b_ssm = xpd[:, d_inner:]                                 # (chunk, d_state)

    neg_a = -jnp.exp(alog_ref[...])                          # (1, N) lane-packed
    dx = delta * xc                                          # (chunk, d_inner)

    # lane-packed slabs: column n*d_inner + c holds state (n, c)
    delta_rep = jnp.concatenate([delta] * d_state, axis=1)   # (chunk, N)
    dA = jnp.exp(delta_rep * neg_a)                          # (chunk, N)
    dBx = jnp.concatenate(
        [b_ssm[:, n:n + 1] * dx for n in range(d_state)], axis=1)  # (chunk, N)

    # log-depth (Hillis-Steele) scan of h_t = a_t * h_{t-1} + b_t over t
    a, b = dA, dBx
    off = 1
    while off < chunk:
        a_sh = jnp.concatenate(
            [jnp.ones((off, N), jnp.float32), a[:chunk - off, :]], axis=0)
        b_sh = jnp.concatenate(
            [jnp.zeros((off, N), jnp.float32), b[:chunk - off, :]], axis=0)
        b = a * b_sh + b
        a = a * a_sh
        off *= 2

    h_all = a * h_carry[...] + b                             # (chunk, N)
    h_carry[...] = h_all[chunk - 1:chunk, :]
    # y_t = sum_n h_t[n, :]  (C == ones in the reference model)
    y = h_all[:, 0:d_inner]
    for n in range(1, d_state):
        y = y + h_all[:, n * d_inner:(n + 1) * d_inner]

    y = y + xc * dpar_ref[...]                               # + x * D
    y = y * _silu(res)
    out = jnp.dot(y.astype(jnp.bfloat16), wout_ref[...],
                  preferred_element_type=jnp.float32)        # (chunk, D)
    o_ref[0] = (xb + out).astype(o_ref.dtype)                # residual


def mamba_block(x, p, tl):
    B, Lp, D = x.shape
    d_inner = p["win_t"].shape[1] // 2
    d_state = p["wpd_t"].shape[1] - d_inner
    d_conv = p["wconv"].shape[0]
    chunk = _mamba_chunk(tl, d_state, d_inner)
    kern = functools.partial(_mamba_kernel, chunk=chunk, d_inner=d_inner,
                             d_state=d_state, d_conv=d_conv)

    # TODO(synk): mark constant-index weight specs pipeline_mode=pl.Buffered(1)
    # once single-buffered weight blocks are verified on the target jax build.
    def wspec(a):
        return pl.BlockSpec(a.shape, lambda bi, ci, _nd=a.ndim: (0,) * _nd)

    weights = (p["norm_w"], p["win_t"], p["wconv"], p["bconv"], p["wpd_t"],
               p["bdt"], p["alog"], p["dpar"], p["wout_t"])
    return pl.pallas_call(
        kern,
        out_shape=jax.ShapeDtypeStruct((B, Lp, D), jnp.bfloat16),
        grid=(B, Lp // chunk),
        in_specs=[pl.BlockSpec((1, chunk, D), lambda bi, ci: (bi, ci, 0))]
                 + [wspec(a) for a in weights],
        out_specs=pl.BlockSpec((1, chunk, D), lambda bi, ci: (bi, ci, 0)),
        scratch_shapes=[pltpu.VMEM((1, d_state * d_inner), jnp.float32),
                        pltpu.VMEM((d_conv - 1, d_inner), jnp.float32)],
        compiler_params=pltpu.CompilerParams(
            dimension_semantics=("parallel", "arbitrary"),
            vmem_limit_bytes=VMEM_LIMIT),
    )(x, *weights)


# ---------------------------------------------------------------------------
# Transformer block = qkv projection + flash attention (+norm1) + GLU (+norm2)
# ---------------------------------------------------------------------------
def _qkv_kernel(x_ref, w_ref, q_ref, kv_ref, *, D):
    y = jnp.dot(x_ref[0], w_ref[...], preferred_element_type=jnp.float32)
    q_ref[0] = y[:, :D].astype(q_ref.dtype)
    kv_ref[0] = y[:, D:].astype(kv_ref.dtype)


def qkv_proj(x, wqkv_t, tl):
    B, Lp, D = x.shape
    return pl.pallas_call(
        functools.partial(_qkv_kernel, D=D),
        out_shape=(jax.ShapeDtypeStruct((B, Lp, D), jnp.bfloat16),
                   jax.ShapeDtypeStruct((B, Lp, 2 * D), jnp.bfloat16)),
        grid=(B, Lp // tl),
        in_specs=[pl.BlockSpec((1, tl, D), lambda bi, i: (bi, i, 0)),
                  pl.BlockSpec(wqkv_t.shape, lambda bi, i: (0, 0))],
        out_specs=(pl.BlockSpec((1, tl, D), lambda bi, i: (bi, i, 0)),
                   pl.BlockSpec((1, tl, 2 * D), lambda bi, i: (bi, i, 0))),
        compiler_params=pltpu.CompilerParams(
            dimension_semantics=("parallel", "parallel"),
            vmem_limit_bytes=VMEM_LIMIT),
    )(x, wqkv_t)


def _attn_kernel(x_ref, q_ref, kv_ref, wo_ref, bo_ref, wn1_ref, o_ref,
                 m_scr, l_scr, acc_scr, *, D, H, tk, L_true, Lp):
    hd = D // H
    scale = 1.0 / math.sqrt(hd)
    ki = pl.program_id(2)
    n_kv = pl.num_programs(2)

    @pl.when(ki == 0)
    def _():
        m_scr[...] = jnp.full_like(m_scr, NEG_INF)
        l_scr[...] = jnp.zeros_like(l_scr)
        acc_scr[...] = jnp.zeros_like(acc_scr)

    q = q_ref[0]                              # (tq, D)  bf16
    kv = kv_ref[0]                            # (tk, 2D) bf16
    k = kv[:, :D]
    v = kv[:, D:]

    if Lp != L_true:                          # mask padded keys (static branch)
        key_idx = ki * tk + lax.broadcasted_iota(jnp.int32, (1, tk), 1)
        key_bias = jnp.where(key_idx < L_true, 0.0, NEG_INF)
    else:
        key_bias = None

    # per-head online softmax with static lane slices (no stack/concat relayouts)
    for h in range(H):
        hs, he = h * hd, (h + 1) * hd
        q_h, k_h, v_h = q[:, hs:he], k[:, hs:he], v[:, hs:he]
        s = lax.dot_general(q_h, k_h, (((1,), (1,)), ((), ())),
                            preferred_element_type=jnp.float32) * scale
        if key_bias is not None:
            s = s + key_bias
        m_prev = m_scr[:, h:h + 1]
        l_prev = l_scr[:, h:h + 1]
        m_new = jnp.maximum(m_prev, jnp.max(s, axis=-1, keepdims=True))
        alpha = jnp.exp(m_prev - m_new)
        p = jnp.exp(s - m_new)
        l_scr[:, h:h + 1] = alpha * l_prev + jnp.sum(p, axis=-1, keepdims=True)
        acc_scr[:, hs:he] = alpha * acc_scr[:, hs:he] + jnp.dot(
            p.astype(jnp.bfloat16), v_h, preferred_element_type=jnp.float32)
        m_scr[:, h:h + 1] = m_new

    @pl.when(ki == n_kv - 1)
    def _():
        for h in range(H):                    # normalize each head in place
            hs, he = h * hd, (h + 1) * hd
            acc_scr[:, hs:he] = acc_scr[:, hs:he] * pl.reciprocal(
                l_scr[:, h:h + 1], approx=True)
        att = jnp.dot(acc_scr[...].astype(jnp.bfloat16), wo_ref[...],
                      preferred_element_type=jnp.float32) + bo_ref[...]
        xq = x_ref[0].astype(jnp.float32)
        o_ref[0] = _rmsnorm(xq + att, wn1_ref[...]).astype(o_ref.dtype)


def attention_block(x, q, kv, p, H, tl, L_true):
    B, Lp, D = x.shape
    n_t = Lp // tl
    kern = functools.partial(_attn_kernel, D=D, H=H, tk=tl, L_true=L_true, Lp=Lp)

    def wspec(a):
        return pl.BlockSpec(a.shape, lambda bi, i, j, _nd=a.ndim: (0,) * _nd)

    weights = (p["wo_t"], p["bo"], p["norm1_w"])
    return pl.pallas_call(
        kern,
        out_shape=jax.ShapeDtypeStruct((B, Lp, D), jnp.bfloat16),
        grid=(B, n_t, n_t),
        in_specs=[pl.BlockSpec((1, tl, D), lambda bi, i, j: (bi, i, 0)),   # x
                  pl.BlockSpec((1, tl, D), lambda bi, i, j: (bi, i, 0)),   # q
                  pl.BlockSpec((1, tl, 2 * D), lambda bi, i, j: (bi, j, 0))]  # kv
                 + [wspec(a) for a in weights],
        out_specs=pl.BlockSpec((1, tl, D), lambda bi, i, j: (bi, i, 0)),
        scratch_shapes=[pltpu.VMEM((tl, H), jnp.float32),
                        pltpu.VMEM((tl, H), jnp.float32),
                        pltpu.VMEM((tl, D), jnp.float32)],
        compiler_params=pltpu.CompilerParams(
            dimension_semantics=("parallel", "parallel", "arbitrary"),
            vmem_limit_bytes=VMEM_LIMIT),
    )(x, q, kv, *weights)


def _ffn_kernel(x_ref, w1_ref, w2_ref, w3_ref, wn2_ref, o_ref, acc_scr):
    fi = pl.program_id(2)
    n_f = pl.num_programs(2)
    x1 = x_ref[0]                                            # (tl, D) bf16

    @pl.when(fi == 0)
    def _():
        acc_scr[...] = x1.astype(jnp.float32)                # residual

    ff = _silu(jnp.dot(x1, w1_ref[...], preferred_element_type=jnp.float32)) \
        * jnp.dot(x1, w2_ref[...], preferred_element_type=jnp.float32)
    acc_scr[...] += jnp.dot(ff.astype(jnp.bfloat16), w3_ref[...],
                            preferred_element_type=jnp.float32)

    @pl.when(fi == n_f - 1)
    def _():
        o_ref[0] = _rmsnorm(acc_scr[...], wn2_ref[...]).astype(o_ref.dtype)


def ffn_block(x1, p, tl):
    B, Lp, D = x1.shape
    d_ff = p["w1_t"].shape[1]
    tff = _ff_tile(d_ff)
    return pl.pallas_call(
        _ffn_kernel,
        out_shape=jax.ShapeDtypeStruct((B, Lp, D), jnp.bfloat16),
        grid=(B, Lp // tl, d_ff // tff),
        in_specs=[pl.BlockSpec((1, tl, D), lambda bi, i, f: (bi, i, 0)),
                  pl.BlockSpec((D, tff), lambda bi, i, f: (0, f)),
                  pl.BlockSpec((D, tff), lambda bi, i, f: (0, f)),
                  pl.BlockSpec((tff, D), lambda bi, i, f: (f, 0)),
                  pl.BlockSpec(p["norm2_w"].shape, lambda bi, i, f: (0, 0))],
        out_specs=pl.BlockSpec((1, tl, D), lambda bi, i, f: (bi, i, 0)),
        scratch_shapes=[pltpu.VMEM((tl, D), jnp.float32)],
        compiler_params=pltpu.CompilerParams(
            dimension_semantics=("parallel", "parallel", "arbitrary"),
            vmem_limit_bytes=VMEM_LIMIT),
    )(x1, p["w1_t"], p["w2_t"], p["w3_t"], p["norm2_w"])


def transformer_block(x, p, num_heads, tl, L_true):
    q, kv = qkv_proj(x, p["wqkv_t"], tl)
    x1 = attention_block(x, q, kv, p, num_heads, tl, L_true)
    return ffn_block(x1, p, tl)


# ---------------------------------------------------------------------------
# final RMSNorm + lm_head (norm hoisted out of the vocab loop via scratch)
# ---------------------------------------------------------------------------
def _lm_head_kernel(x_ref, wn_ref, wlm_ref, o_ref, xn_scr):
    @pl.when(pl.program_id(2) == 0)
    def _():
        xn_scr[...] = _rmsnorm(x_ref[0].astype(jnp.float32),
                               wn_ref[...]).astype(jnp.bfloat16)

    o_ref[0] = jnp.dot(xn_scr[...], wlm_ref[...],
                       preferred_element_type=jnp.float32)


def lm_head(x, norm_w, wlm_t, tl):
    B, Lp, D = x.shape
    V = wlm_t.shape[1]
    tv = _vocab_tile(V)
    return pl.pallas_call(
        _lm_head_kernel,
        out_shape=jax.ShapeDtypeStruct((B, Lp, V), jnp.float32),
        grid=(B, Lp // tl, V // tv),
        in_specs=[pl.BlockSpec((1, tl, D), lambda bi, i, j: (bi, i, 0)),
                  pl.BlockSpec(norm_w.shape, lambda bi, i, j: (0, 0)),
                  pl.BlockSpec((D, tv), lambda bi, i, j: (0, j))],
        out_specs=pl.BlockSpec((1, tl, tv), lambda bi, i, j: (bi, i, j)),
        scratch_shapes=[pltpu.VMEM((tl, D), jnp.bfloat16)],
        compiler_params=pltpu.CompilerParams(
            dimension_semantics=("parallel", "parallel", "arbitrary"),
            vmem_limit_bytes=VMEM_LIMIT),
    )(x, norm_w, wlm_t)


# ---------------------------------------------------------------------------
# deterministic parameter init (shapes follow the PyTorch module __init__)
# ---------------------------------------------------------------------------
def _dense(key, fan_in, fan_out, scale=0.02):
    w = scale * jax.random.normal(key, (fan_in, fan_out), jnp.float32)
    return w.astype(jnp.bfloat16)            # bf16 MXU operands, f32 accumulate


def init_params(key, vocab, d_model, num_heads, num_layers,
                mamba_ratio=0.5, d_state=16, d_conv=4, expand=2):
    d_inner = expand * d_model
    d_ff = 4 * d_model
    keys = iter(jax.random.split(key, 8 * num_layers + 8))
    params = {
        "num_heads": num_heads,
        "embedding": 0.02 * jax.random.normal(next(keys), (vocab, d_model),
                                              jnp.float32),
    }
    num_mamba = int(num_layers * mamba_ratio)
    layers, n_m = [], 0
    for i in range(num_layers):
        if i % 2 == 0 and n_m < num_mamba:
            n_m += 1
            wdt_t = 0.02 * jax.random.normal(next(keys), (d_inner, d_inner),
                                             jnp.float32)
            wxpb_t = 0.02 * jax.random.normal(next(keys), (d_inner, d_state),
                                              jnp.float32)
            alog = jnp.log(jnp.arange(1, d_state + 1, dtype=jnp.float32))
            p = {
                "norm_w": jnp.ones((1, d_model), jnp.float32),
                "win_t": _dense(next(keys), d_model, 2 * d_inner),
                "wconv": 0.1 * jax.random.normal(next(keys), (d_conv, d_inner),
                                                 jnp.float32),
                "bconv": 0.02 * jax.random.normal(next(keys), (1, d_inner),
                                                  jnp.float32),
                # fused [dt_proj | x_proj B-columns], pre-transposed, bf16
                "wpd_t": jnp.concatenate([wdt_t, wxpb_t],
                                         axis=1).astype(jnp.bfloat16),
                "bdt": 0.02 * jax.random.normal(next(keys), (1, d_inner),
                                                jnp.float32),
                # A_log lane-packed: alog[0, n*d_inner + c] = log(n + 1)
                "alog": jnp.repeat(alog, d_inner)[None, :],
                "dpar": jnp.ones((1, d_inner), jnp.float32),
                "wout_t": _dense(next(keys), d_inner, d_model),
            }
            layers.append(("mamba", p))
        else:
            p = {
                "wqkv_t": _dense(next(keys), d_model, 3 * d_model),
                "wo_t": _dense(next(keys), d_model, d_model),
                "bo": 0.02 * jax.random.normal(next(keys), (1, d_model),
                                               jnp.float32),
                "norm1_w": jnp.ones((1, d_model), jnp.float32),
                "norm2_w": jnp.ones((1, d_model), jnp.float32),
                "w1_t": _dense(next(keys), d_model, d_ff),
                "w2_t": _dense(next(keys), d_model, d_ff),
                "w3_t": _dense(next(keys), d_ff, d_model),
            }
            layers.append(("attn", p))
    params["layers"] = layers
    params["norm_w"] = jnp.ones((1, d_model), jnp.float32)
    params["wlm_t"] = _dense(next(keys), d_model, vocab)
    return params


# ---------------------------------------------------------------------------
# full forward
# ---------------------------------------------------------------------------
def forward(params, input_ids):
    B, L = input_ids.shape
    tl = _seq_tile(L)
    Lp = _round_up(L, tl)
    if Lp != L:                                # pad sequence; keys masked in attn,
        input_ids = jnp.pad(input_ids, ((0, 0), (0, Lp - L)))  # mamba is causal
    # TODO(synk): embedding gather kept in plain JAX (table lookup, not a matmul
    # hot path); a DMA-gather Pallas kernel would be needed for huge vocabs.
    x = params["embedding"][input_ids].astype(jnp.bfloat16)   # (B, Lp, D)
    for kind, p in params["layers"]:
        if kind == "mamba":
            x = mamba_block(x, p, tl)
        else:
            x = transformer_block(x, p, params["num_heads"], tl, L)
    logits = lm_head(x, params["norm_w"], params["wlm_t"], tl)
    return logits[:, :L, :]                                   # (B, L, vocab)


if __name__ == "__main__":
    key = jax.random.PRNGKey(0)
    vocab, d_model, num_heads, num_layers = 64, 32, 4, 4
    B, L = 2, 8

    params = init_params(key, vocab, d_model, num_heads, num_layers)
    ids_key = jax.random.fold_in(key, 999)
    input_ids = jax.random.randint(ids_key, (B, L), 0, vocab, dtype=jnp.int32)

    logits = forward(params, input_ids)
    jax.block_until_ready(logits)

    assert logits.shape == (B, L, vocab), logits.shape
    assert bool(jnp.all(jnp.isfinite(logits)))
    print("KERNEL_OK")
</pallas_src>

<mosaic_0001>
module attributes {stable_mosaic.version = 11 : i64} {
  func.func @_mamba_kernel(%arg0: i32, %arg1: i32, %arg2: memref<1x8x32xbf16, #tpu.memory_space<vmem>>, %arg3: memref<1x32xf32, #tpu.memory_space<vmem>>, %arg4: memref<32x128xbf16, #tpu.memory_space<vmem>>, %arg5: memref<4x64xf32, #tpu.memory_space<vmem>>, %arg6: memref<1x64xf32, #tpu.memory_space<vmem>>, %arg7: memref<64x80xbf16, #tpu.memory_space<vmem>>, %arg8: memref<1x64xf32, #tpu.memory_space<vmem>>, %arg9: memref<1x1024xf32, #tpu.memory_space<vmem>>, %arg10: memref<1x64xf32, #tpu.memory_space<vmem>>, %arg11: memref<64x32xbf16, #tpu.memory_space<vmem>>, %arg12: memref<1x8x32xbf16, #tpu.memory_space<vmem>>, %arg13: memref<1x1024xf32, #tpu.memory_space<vmem>>, %arg14: memref<3x64xf32, #tpu.memory_space<vmem>>) attributes {dimension_semantics = [#tpu.dimension_semantics<parallel>, #tpu.dimension_semantics<arbitrary>], iteration_bounds = array<i64: 2, 1>, scalar_prefetch = 0 : i64, scratch_operands = 2 : i64, tpu.core_type = #tpu.core_type<tc>, window_params = [{transform_indices = @transform_0, window_bounds = array<i64: 1, 8, 32>}, {pipeline_mode = #tpu.pipeline_mode<synchronous>, transform_indices = @transform_1, window_bounds = array<i64: 1, 32>}, {pipeline_mode = #tpu.pipeline_mode<synchronous>, transform_indices = @transform_2, window_bounds = array<i64: 32, 128>}, {pipeline_mode = #tpu.pipeline_mode<synchronous>, transform_indices = @transform_3, window_bounds = array<i64: 4, 64>}, {pipeline_mode = #tpu.pipeline_mode<synchronous>, transform_indices = @transform_4, window_bounds = array<i64: 1, 64>}, {pipeline_mode = #tpu.pipeline_mode<synchronous>, transform_indices = @transform_5, window_bounds = array<i64: 64, 80>}, {pipeline_mode = #tpu.pipeline_mode<synchronous>, transform_indices = @transform_6, window_bounds = array<i64: 1, 64>}, {pipeline_mode = #tpu.pipeline_mode<synchronous>, transform_indices = @transform_7, window_bounds = array<i64: 1, 1024>}, {pipeline_mode = #tpu.pipeline_mode<synchronous>, transform_indices = @transform_8, window_bounds = array<i64: 1, 64>}, {pipeline_mode = #tpu.pipeline_mode<synchronous>, transform_indices = @transform_9, window_bounds = array<i64: 64, 32>}, {transform_indices = @transform_10, window_bounds = array<i64: 1, 8, 32>}]} {
    %c0_i32 = arith.constant 0 : i32
    %0 = arith.cmpi eq, %arg1, %c0_i32 : i32
    %1 = arith.extui %0 : i1 to i32
    %c0_i32_0 = arith.constant 0 : i32
    %2 = arith.cmpi ne, %1, %c0_i32_0 : i32
    scf.if %2 {
      %cst_52 = arith.constant 0.000000e+00 : f32
      %214 = vector.broadcast %cst_52 : f32 to vector<1x1024xf32>
      %c0_53 = arith.constant 0 : index
      %c0_54 = arith.constant 0 : index
      %215 = vector.load %arg13[%c0_53, %c0_54] : memref<1x1024xf32, #tpu.memory_space<vmem>>, vector<1x1024xf32>
      tpu.vector_store %arg13[%c0_53, %c0_54], %214 {strides = array<i32>} : memref<1x1024xf32, #tpu.memory_space<vmem>>, vector<1x1024xf32>,
      %cst_55 = arith.constant 0.000000e+00 : f32
      %216 = vector.broadcast %cst_55 : f32 to vector<3x64xf32>
      %c0_56 = arith.constant 0 : index
      %c0_57 = arith.constant 0 : index
      %217 = vector.load %arg14[%c0_56, %c0_57] : memref<3x64xf32, #tpu.memory_space<vmem>>, vector<3x64xf32>
      tpu.vector_store %arg14[%c0_56, %c0_57], %216 {strides = array<i32>} : memref<3x64xf32, #tpu.memory_space<vmem>>, vector<3x64xf32>,
    } else {
    }
    %c0 = arith.constant 0 : index
    %c0_1 = arith.constant 0 : index
    %c0_2 = arith.constant 0 : index
    %3 = vector.load %arg2[%c0, %c0_1, %c0_2] : memref<1x8x32xbf16, #tpu.memory_space<vmem>>, vector<1x8x32xbf16>
    %4 = vector.shape_cast %3 : vector<1x8x32xbf16> to vector<8x32xbf16>
    %5 = arith.extf %4 : vector<8x32xbf16> to vector<8x32xf32>
    %c0_3 = arith.constant 0 : index
    %c0_4 = arith.constant 0 : index
    %6 = vector.load %arg3[%c0_3, %c0_4] : memref<1x32xf32, #tpu.memory_space<vmem>>, vector<1x32xf32>
    %7 = arith.mulf %5, %5 : vector<8x32xf32>
    %cst = arith.constant dense<0.000000e+00> : vector<8xf32>
    %8 = vector.multi_reduction <add>, %7, %cst [1] : vector<8x32xf32> to vector<8xf32>
    %9 = vector.shape_cast %8 : vector<8xf32> to vector<8x1xf32>
    %cst_5 = arith.constant 3.200000e+01 : f32
    %10 = vector.broadcast %cst_5 : f32 to vector<8x1xf32>
    %11 = arith.divf %9, %10 : vector<8x1xf32>
    %cst_6 = arith.constant 1.1920929E-7 : f32
    %12 = vector.broadcast %cst_6 : f32 to vector<8x1xf32>
    %13 = arith.addf %11, %12 : vector<8x1xf32>
    %14 = math.rsqrt %13 : vector<8x1xf32>
    %15 = vector.broadcast %14 : vector<8x1xf32> to vector<8x32xf32>
    %16 = arith.mulf %5, %15 : vector<8x32xf32>
    %17 = vector.broadcast %6 : vector<1x32xf32> to vector<8x32xf32>
    %18 = arith.mulf %16, %17 : vector<8x32xf32>
    %19 = arith.truncf %18 : vector<8x32xf32> to vector<8x32xbf16>
    %c0_7 = arith.constant 0 : index
    %c0_8 = arith.constant 0 : index
    %20 = vector.load %arg4[%c0_7, %c0_8] : memref<32x128xbf16, #tpu.memory_space<vmem>>, vector<32x128xbf16>
    %cst_9 = arith.constant dense<0.000000e+00> : vector<8x128xf32>
    %21 = tpu.matmul %19, %20, %cst_9 {dimension_numbers = #tpu.dot_dimension_numbers<[1], [0], [0], [1], [0, 0, 1, 1], [], []>} : vector<8x32xbf16>, vector<32x128xbf16>, vector<8x128xf32> -> vector<8x128xf32>
    %22 = vector.extract_strided_slice %21 {offsets = [0, 0], sizes = [8, 64], strides = [1, 1]} : vector<8x128xf32> to vector<8x64xf32>
    %23 = vector.extract_strided_slice %21 {offsets = [0, 64], sizes = [8, 64], strides = [1, 1]} : vector<8x128xf32> to vector<8x64xf32>
    %c0_10 = arith.constant 0 : index
    %c0_11 = arith.constant 0 : index
    %24 = vector.load %arg14[%c0_10, %c0_11] : memref<3x64xf32, #tpu.memory_space<vmem>>, vector<3x64xf32>
    %25 = tpu.concatenate %24, %22 in 0 : vector<3x64xf32>, vector<8x64xf32> -> vector<11x64xf32>
    %cst_12 = arith.constant 0.000000e+00 : f32
    %26 = vector.broadcast %cst_12 : f32 to vector<8x64xf32>
    %c0_13 = arith.constant 0 : index
    %c0_14 = arith.constant 0 : index
    %27 = vector.load %arg5[%c0_13, %c0_14] : memref<4x64xf32, #tpu.memory_space<vmem>>, vector<1x64xf32>
    %28 = vector.extract_strided_slice %25 {offsets = [0, 0], sizes = [8, 64], strides = [1, 1]} : vector<11x64xf32> to vector<8x64xf32>
    %29 = vector.broadcast %27 : vector<1x64xf32> to vector<8x64xf32>
    %30 = arith.mulf %29, %28 : vector<8x64xf32>
    %31 = arith.addf %26, %30 : vector<8x64xf32>
    %c1 = arith.constant 1 : index
    %c0_15 = arith.constant 0 : index
    %32 = vector.load %arg5[%c1, %c0_15] : memref<4x64xf32, #tpu.memory_space<vmem>>, vector<1x64xf32>
    %33 = vector.extract_strided_slice %25 {offsets = [1, 0], sizes = [8, 64], strides = [1, 1]} : vector<11x64xf32> to vector<8x64xf32>
    %34 = vector.broadcast %32 : vector<1x64xf32> to vector<8x64xf32>
    %35 = arith.mulf %34, %33 : vector<8x64xf32>
    %36 = arith.addf %31, %35 : vector<8x64xf32>
    %c2 = arith.constant 2 : index
    %c0_16 = arith.constant 0 : index
    %37 = vector.load %arg5[%c2, %c0_16] : memref<4x64xf32, #tpu.memory_space<vmem>>, vector<1x64xf32>
    %38 = vector.extract_strided_slice %25 {offsets = [2, 0], sizes = [8, 64], strides = [1, 1]} : vector<11x64xf32> to vector<8x64xf32>
    %39 = vector.broadcast %37 : vector<1x64xf32> to vector<8x64xf32>
    %40 = arith.mulf %39, %38 : vector<8x64xf32>
    %41 = arith.addf %36, %40 : vector<8x64xf32>
    %c3 = arith.constant 3 : index
    %c0_17 = arith.constant 0 : index
    %42 = vector.load %arg5[%c3, %c0_17] : memref<4x64xf32, #tpu.memory_space<vmem>>, vector<1x64xf32>
    %43 = vector.extract_strided_slice %25 {offsets = [3, 0], sizes = [8, 64], strides = [1, 1]} : vector<11x64xf32> to vector<8x64xf32>
    %44 = vector.broadcast %42 : vector<1x64xf32> to vector<8x64xf32>
    %45 = arith.mulf %44, %43 : vector<8x64xf32>
    %46 = arith.addf %41, %45 : vector<8x64xf32>
    %47 = vector.extract_strided_slice %25 {offsets = [8, 0], sizes = [3, 64], strides = [1, 1]} : vector<11x64xf32> to vector<3x64xf32>
    %c0_18 = arith.constant 0 : index
    %c0_19 = arith.constant 0 : index
    %48 = vector.load %arg14[%c0_18, %c0_19] : memref<3x64xf32, #tpu.memory_space<vmem>>, vector<3x64xf32>
    tpu.vector_store %arg14[%c0_18, %c0_19], %47 {strides = array<i32>} : memref<3x64xf32, #tpu.memory_space<vmem>>, vector<3x64xf32>,
    %c0_20 = arith.constant 0 : index
    %c0_21 = arith.constant 0 : index
    %49 = vector.load %arg6[%c0_20, %c0_21] : memref<1x64xf32, #tpu.memory_space<vmem>>, vector<1x64xf32>
    %50 = vector.broadcast %49 : vector<1x64xf32> to vector<8x64xf32>
    %51 = arith.addf %46, %50 : vector<8x64xf32>
    %52 = arith.negf %51 : vector<8x64xf32>
    %53 = math.exp %52 : vector<8x64xf32>
    %cst_22 = arith.constant 1.000000e+00 : f32
    %54 = vector.broadcast %cst_22 : f32 to vector<8x64xf32>
    %55 = arith.addf %54, %53 : vector<8x64xf32>
    %56 = arith.divf %54, %55 : vector<8x64xf32>
    %57 = arith.mulf %51, %56 : vector<8x64xf32>
    %58 = arith.truncf %57 : vector<8x64xf32> to vector<8x64xbf16>
    %c0_23 = arith.constant 0 : index
    %c0_24 = arith.constant 0 : index
    %59 = vector.load %arg7[%c0_23, %c0_24] : memref<64x80xbf16, #tpu.memory_space<vmem>>, vector<64x80xbf16>
    %cst_25 = arith.constant dense<0.000000e+00> : vector<8x80xf32>
    %60 = tpu.matmul %58, %59, %cst_25 {dimension_numbers = #tpu.dot_dimension_numbers<[1], [0], [0], [1], [0, 0, 1, 1], [], []>} : vector<8x64xbf16>, vector<64x80xbf16>, vector<8x80xf32> -> vector<8x80xf32>
    %61 = vector.extract_strided_slice %60 {offsets = [0, 0], sizes = [8, 64], strides = [1, 1]} : vector<8x80xf32> to vector<8x64xf32>
    %c0_26 = arith.constant 0 : index
    %c0_27 = arith.constant 0 : index
    %62 = vector.load %arg8[%c0_26, %c0_27] : memref<1x64xf32, #tpu.memory_space<vmem>>, vector<1x64xf32>
    %63 = vector.broadcast %62 : vector<1x64xf32> to vector<8x64xf32>
    %64 = arith.addf %61, %63 : vector<8x64xf32>
    %cst_28 = arith.constant 2.000000e+01 : f32
    %65 = vector.broadcast %cst_28 : f32 to vector<8x64xf32>
    %66 = arith.cmpf ogt, %64, %65 : vector<8x64xf32>
    %cst_29 = arith.constant 2.000000e+01 : f32
    %67 = vector.broadcast %cst_29 : f32 to vector<8x64xf32>
    %68 = arith.minimumf %64, %67 : vector<8x64xf32>
    %69 = math.exp %68 : vector<8x64xf32>
    %70 = math.log1p %69 : vector<8x64xf32>
    %71 = arith.select %66, %64, %70 : vector<8x64xi1>, vector<8x64xf32>
    %72 = vector.extract_strided_slice %60 {offsets = [0, 64], sizes = [8, 16], strides = [1, 1]} : vector<8x80xf32> to vector<8x16xf32>
    %c0_30 = arith.constant 0 : index
    %c0_31 = arith.constant 0 : index
    %73 = vector.load %arg9[%c0_30, %c0_31] : memref<1x1024xf32, #tpu.memory_space<vmem>>, vector<1x1024xf32>
    %74 = math.exp %73 : vector<1x1024xf32>
    %cst_32 = arith.constant 0.000000e+00 : f32
    %75 = vector.broadcast %cst_32 : f32 to vector<1x1024xf32>
    %76 = arith.subf %75, %74 : vector<1x1024xf32>
    %77 = arith.mulf %71, %57 : vector<8x64xf32>
    %78 = tpu.concatenate %71, %71, %71, %71, %71, %71, %71, %71, %71, %71, %71, %71, %71, %71, %71, %71 in 1 : vector<8x64xf32>, vector<8x64xf32>, vector<8x64xf32>, vector<8x64xf32>, vector<8x64xf32>, vector<8x64xf32>, vector<8x64xf32>, vector<8x64xf32>, vector<8x64xf32>, vector<8x64xf32>, vector<8x64xf32>, vector<8x64xf32>, vector<8x64xf32>, vector<8x64xf32>, vector<8x64xf32>, vector<8x64xf32> -> vector<8x1024xf32>
    %79 = vector.broadcast %76 : vector<1x1024xf32> to vector<8x1024xf32>
    %80 = arith.mulf %78, %79 : vector<8x1024xf32>
    %81 = math.exp %80 : vector<8x1024xf32>
    %82 = vector.extract_strided_slice %72 {offsets = [0, 0], sizes = [8, 1], strides = [1, 1]} : vector<8x16xf32> to vector<8x1xf32>
    %83 = vector.broadcast %82 : vector<8x1xf32> to vector<8x64xf32>
    %84 = arith.mulf %83, %77 : vector<8x64xf32>
    %85 = vector.extract_strided_slice %72 {offsets = [0, 1], sizes = [8, 1], strides = [1, 1]} : vector<8x16xf32> to vector<8x1xf32>
    %86 = vector.broadcast %85 : vector<8x1xf32> to vector<8x64xf32>
    %87 = arith.mulf %86, %77 : vector<8x64xf32>
    %88 = vector.extract_strided_slice %72 {offsets = [0, 2], sizes = [8, 1], strides = [1, 1]} : vector<8x16xf32> to vector<8x1xf32>
    %89 = vector.broadcast %88 : vector<8x1xf32> to vector<8x64xf32>
    %90 = arith.mulf %89, %77 : vector<8x64xf32>
    %91 = vector.extract_strided_slice %72 {offsets = [0, 3], sizes = [8, 1], strides = [1, 1]} : vector<8x16xf32> to vector<8x1xf32>
    %92 = vector.broadcast %91 : vector<8x1xf32> to vector<8x64xf32>
    %93 = arith.mulf %92, %77 : vector<8x64xf32>
    %94 = vector.extract_strided_slice %72 {offsets = [0, 4], sizes = [8, 1], strides = [1, 1]} : vector<8x16xf32> to vector<8x1xf32>
    %95 = vector.broadcast %94 : vector<8x1xf32> to vector<8x64xf32>
    %96 = arith.mulf %95, %77 : vector<8x64xf32>
    %97 = vector.extract_strided_slice %72 {offsets = [0, 5], sizes = [8, 1], strides = [1, 1]} : vector<8x16xf32> to vector<8x1xf32>
    %98 = vector.broadcast %97 : vector<8x1xf32> to vector<8x64xf32>
    %99 = arith.mulf %98, %77 : vector<8x64xf32>
    %100 = vector.extract_strided_slice %72 {offsets = [0, 6], sizes = [8, 1], strides = [1, 1]} : vector<8x16xf32> to vector<8x1xf32>
    %101 = vector.broadcast %100 : vector<8x1xf32> to vector<8x64xf32>
    %102 = arith.mulf %101, %77 : vector<8x64xf32>
    %103 = vector.extract_strided_slice %72 {offsets = [0, 7], sizes = [8, 1], strides = [1, 1]} : vector<8x16xf32> to vector<8x1xf32>
    %104 = vector.broadcast %103 : vector<8x1xf32> to vector<8x64xf32>
    %105 = arith.mulf %104, %77 : vector<8x64xf32>
    %106 = vector.extract_strided_slice %72 {offsets = [0, 8], sizes = [8, 1], strides = [1, 1]} : vector<8x16xf32> to vector<8x1xf32>
    %107 = vector.broadcast %106 : vector<8x1xf32> to vector<8x64xf32>
    %108 = arith.mulf %107, %77 : vector<8x64xf32>
    %109 = vector.extract_strided_slice %72 {offsets = [0, 9], sizes = [8, 1], strides = [1, 1]} : vector<8x16xf32> to vector<8x1xf32>
    %110 = vector.broadcast %109 : vector<8x1xf32> to vector<8x64xf32>
    %111 = arith.mulf %110, %77 : vector<8x64xf32>
    %112 = vector.extract_strided_slice %72 {offsets = [0, 10], sizes = [8, 1], strides = [1, 1]} : vector<8x16xf32> to vector<8x1xf32>
    %113 = vector.broadcast %112 : vector<8x1xf32> to vector<8x64xf32>
    %114 = arith.mulf %113, %77 : vector<8x64xf32>
    %115 = vector.extract_strided_slice %72 {offsets = [0, 11], sizes = [8, 1], strides = [1, 1]} : vector<8x16xf32> to vector<8x1xf32>
    %116 = vector.broadcast %115 : vector<8x1xf32> to vector<8x64xf32>
    %117 = arith.mulf %116, %77 : vector<8x64xf32>
    %118 = vector.extract_strided_slice %72 {offsets = [0, 12], sizes = [8, 1], strides = [1, 1]} : vector<8x16xf32> to vector<8x1xf32>
    %119 = vector.broadcast %118 : vector<8x1xf32> to vector<8x64xf32>
    %120 = arith.mulf %119, %77 : vector<8x64xf32>
    %121 = vector.extract_strided_slice %72 {offsets = [0, 13], sizes = [8, 1], strides = [1, 1]} : vector<8x16xf32> to vector<8x1xf32>
    %122 = vector.broadcast %121 : vector<8x1xf32> to vector<8x64xf32>
    %123 = arith.mulf %122, %77 : vector<8x64xf32>
    %124 = vector.extract_strided_slice %72 {offsets = [0, 14], sizes = [8, 1], strides = [1, 1]} : vector<8x16xf32> to vector<8x1xf32>
    %125 = vector.broadcast %124 : vector<8x1xf32> to vector<8x64xf32>
    %126 = arith.mulf %125, %77 : vector<8x64xf32>
    %127 = vector.extract_strided_slice %72 {offsets = [0, 15], sizes = [8, 1], strides = [1, 1]} : vector<8x16xf32> to vector<8x1xf32>
    %128 = vector.broadcast %127 : vector<8x1xf32> to vector<8x64xf32>
    %129 = arith.mulf %128, %77 : vector<8x64xf32>
    %130 = tpu.concatenate %84, %87, %90, %93, %96, %99, %102, %105, %108, %111, %114, %117, %120, %123, %126, %129 in 1 : vector<8x64xf32>, vector<8x64xf32>, vector<8x64xf32>, vector<8x64xf32>, vector<8x64xf32>, vector<8x64xf32>, vector<8x64xf32>, vector<8x64xf32>, vector<8x64xf32>, vector<8x64xf32>, vector<8x64xf32>, vector<8x64xf32>, vector<8x64xf32>, vector<8x64xf32>, vector<8x64xf32>, vector<8x64xf32> -> vector<8x1024xf32>
    %cst_33 = arith.constant 1.000000e+00 : f32
    %131 = vector.broadcast %cst_33 : f32 to vector<1x1024xf32>
    %132 = vector.extract_strided_slice %81 {offsets = [0, 0], sizes = [7, 1024], strides = [1, 1]} : vector<8x1024xf32> to vector<7x1024xf32>
    %133 = tpu.concatenate %131, %132 in 0 : vector<1x1024xf32>, vector<7x1024xf32> -> vector<8x1024xf32>
    %cst_34 = arith.constant 0.000000e+00 : f32
    %134 = vector.broadcast %cst_34 : f32 to vector<1x1024xf32>
    %135 = vector.extract_strided_slice %130 {offsets = [0, 0], sizes = [7, 1024], strides = [1, 1]} : vector<8x1024xf32> to vector<7x1024xf32>
    %136 = tpu.concatenate %134, %135 in 0 : vector<1x1024xf32>, vector<7x1024xf32> -> vector<8x1024xf32>
    %137 = arith.mulf %81, %136 : vector<8x1024xf32>
    %138 = arith.addf %137, %130 : vector<8x1024xf32>
    %139 = arith.mulf %81, %133 : vector<8x1024xf32>
    %cst_35 = arith.constant 1.000000e+00 : f32
    %140 = vector.broadcast %cst_35 : f32 to vector<2x1024xf32>
    %141 = vector.extract_strided_slice %139 {offsets = [0, 0], sizes = [6, 1024], strides = [1, 1]} : vector<8x1024xf32> to vector<6x1024xf32>
    %142 = tpu.concatenate %140, %141 in 0 : vector<2x1024xf32>, vector<6x1024xf32> -> vector<8x1024xf32>
    %cst_36 = arith.constant 0.000000e+00 : f32
    %143 = vector.broadcast %cst_36 : f32 to vector<2x1024xf32>
    %144 = vector.extract_strided_slice %138 {offsets = [0, 0], sizes = [6, 1024], strides = [1, 1]} : vector<8x1024xf32> to vector<6x1024xf32>
    %145 = tpu.concatenate %143, %144 in 0 : vector<2x1024xf32>, vector<6x1024xf32> -> vector<8x1024xf32>
    %146 = arith.mulf %139, %145 : vector<8x1024xf32>
    %147 = arith.addf %146, %138 : vector<8x1024xf32>
    %148 = arith.mulf %139, %142 : vector<8x1024xf32>
    %cst_37 = arith.constant 1.000000e+00 : f32
    %149 = vector.broadcast %cst_37 : f32 to vector<4x1024xf32>
    %150 = vector.extract_strided_slice %148 {offsets = [0, 0], sizes = [4, 1024], strides = [1, 1]} : vector<8x1024xf32> to vector<4x1024xf32>
    %151 = tpu.concatenate %149, %150 in 0 : vector<4x1024xf32>, vector<4x1024xf32> -> vector<8x1024xf32>
    %cst_38 = arith.constant 0.000000e+00 : f32
    %152 = vector.broadcast %cst_38 : f32 to vector<4x1024xf32>
    %153 = vector.extract_strided_slice %147 {offsets = [0, 0], sizes = [4, 1024], strides = [1, 1]} : vector<8x1024xf32> to vector<4x1024xf32>
    %154 = tpu.concatenate %152, %153 in 0 : vector<4x1024xf32>, vector<4x1024xf32> -> vector<8x1024xf32>
    %155 = arith.mulf %148, %154 : vector<8x1024xf32>
    %156 = arith.addf %155, %147 : vector<8x1024xf32>
    %157 = arith.mulf %148, %151 : vector<8x1024xf32>
    %c0_39 = arith.constant 0 : index
    %c0_40 = arith.constant 0 : index
    %158 = vector.load %arg13[%c0_39, %c0_40] : memref<1x1024xf32, #tpu.memory_space<vmem>>, vector<1x1024xf32>
    %159 = vector.broadcast %158 : vector<1x1024xf32> to vector<8x1024xf32>
    %160 = arith.mulf %157, %159 : vector<8x1024xf32>
    %161 = arith.addf %160, %156 : vector<8x1024xf32>
    %162 = vector.extract_strided_slice %161 {offsets = [7, 0], sizes = [1, 1024], strides = [1, 1]} : vector<8x1024xf32> to vector<1x1024xf32>
    %c0_41 = arith.constant 0 : index
    %c0_42 = arith.constant 0 : index
    %163 = vector.load %arg13[%c0_41, %c0_42] : memref<1x1024xf32, #tpu.memory_space<vmem>>, vector<1x1024xf32>
    tpu.vector_store %arg13[%c0_41, %c0_42], %162 {strides = array<i32>} : memref<1x1024xf32, #tpu.memory_space<vmem>>, vector<1x1024xf32>,
    %164 = vector.extract_strided_slice %161 {offsets = [0, 0], sizes = [8, 64], strides = [1, 1]} : vector<8x1024xf32> to vector<8x64xf32>
    %165 = vector.extract_strided_slice %161 {offsets = [0, 64], sizes = [8, 64], strides = [1, 1]} : vector<8x1024xf32> to vector<8x64xf32>
    %166 = arith.addf %164, %165 : vector<8x64xf32>
    %167 = vector.extract_strided_slice %161 {offsets = [0, 128], sizes = [8, 64], strides = [1, 1]} : vector<8x1024xf32> to vector<8x64xf32>
    %168 = arith.addf %166, %167 : vector<8x64xf32>
    %169 = vector.extract_strided_slice %161 {offsets = [0, 192], sizes = [8, 64], strides = [1, 1]} : vector<8x1024xf32> to vector<8x64xf32>
    %170 = arith.addf %168, %169 : vector<8x64xf32>
    %171 = vector.extract_strided_slice %161 {offsets = [0, 256], sizes = [8, 64], strides = [1, 1]} : vector<8x1024xf32> to vector<8x64xf32>
    %172 = arith.addf %170, %171 : vector<8x64xf32>
    %173 = vector.extract_strided_slice %161 {offsets = [0, 320], sizes = [8, 64], strides = [1, 1]} : vector<8x1024xf32> to vector<8x64xf32>
    %174 = arith.addf %172, %173 : vector<8x64xf32>
    %175 = vector.extract_strided_slice %161 {offsets = [0, 384], sizes = [8, 64], strides = [1, 1]} : vector<8x1024xf32> to vector<8x64xf32>
    %176 = arith.addf %174, %175 : vector<8x64xf32>
    %177 = vector.extract_strided_slice %161 {offsets = [0, 448], sizes = [8, 64], strides = [1, 1]} : vector<8x1024xf32> to vector<8x64xf32>
    %178 = arith.addf %176, %177 : vector<8x64xf32>
    %179 = vector.extract_strided_slice %161 {offsets = [0, 512], sizes = [8, 64], strides = [1, 1]} : vector<8x1024xf32> to vector<8x64xf32>
    %180 = arith.addf %178, %179 : vector<8x64xf32>
    %181 = vector.extract_strided_slice %161 {offsets = [0, 576], sizes = [8, 64], strides = [1, 1]} : vector<8x1024xf32> to vector<8x64xf32>
    %182 = arith.addf %180, %181 : vector<8x64xf32>
    %183 = vector.extract_strided_slice %161 {offsets = [0, 640], sizes = [8, 64], strides = [1, 1]} : vector<8x1024xf32> to vector<8x64xf32>
    %184 = arith.addf %182, %183 : vector<8x64xf32>
    %185 = vector.extract_strided_slice %161 {offsets = [0, 704], sizes = [8, 64], strides = [1, 1]} : vector<8x1024xf32> to vector<8x64xf32>
    %186 = arith.addf %184, %185 : vector<8x64xf32>
    %187 = vector.extract_strided_slice %161 {offsets = [0, 768], sizes = [8, 64], strides = [1, 1]} : vector<8x1024xf32> to vector<8x64xf32>
    %188 = arith.addf %186, %187 : vector<8x64xf32>
    %189 = vector.extract_strided_slice %161 {offsets = [0, 832], sizes = [8, 64], strides = [1, 1]} : vector<8x1024xf32> to vector<8x64xf32>
    %190 = arith.addf %188, %189 : vector<8x64xf32>
    %191 = vector.extract_strided_slice %161 {offsets = [0, 896], sizes = [8, 64], strides = [1, 1]} : vector<8x1024xf32> to vector<8x64xf32>
    %192 = arith.addf %190, %191 : vector<8x64xf32>
    %193 = vector.extract_strided_slice %161 {offsets = [0, 960], sizes = [8, 64], strides = [1, 1]} : vector<8x1024xf32> to vector<8x64xf32>
    %194 = arith.addf %192, %193 : vector<8x64xf32>
    %c0_43 = arith.constant 0 : index
    %c0_44 = arith.constant 0 : index
    %195 = vector.load %arg10[%c0_43, %c0_44] : memref<1x64xf32, #tpu.memory_space<vmem>>, vector<1x64xf32>
    %196 = vector.broadcast %195 : vector<1x64xf32> to vector<8x64xf32>
    %197 = arith.mulf %57, %196 : vector<8x64xf32>
    %198 = arith.addf %194, %197 : vector<8x64xf32>
    %199 = arith.negf %23 : vector<8x64xf32>
    %200 = math.exp %199 : vector<8x64xf32>
    %cst_45 = arith.constant 1.000000e+00 : f32
    %201 = vector.broadcast %cst_45 : f32 to vector<8x64xf32>
    %202 = arith.addf %201, %200 : vector<8x64xf32>
    %203 = arith.divf %201, %202 : vector<8x64xf32>
    %204 = arith.mulf %23, %203 : vector<8x64xf32>
    %205 = arith.mulf %198, %204 : vector<8x64xf32>
    %206 = arith.truncf %205 : vector<8x64xf32> to vector<8x64xbf16>
    %c0_46 = arith.constant 0 : index
    %c0_47 = arith.constant 0 : index
    %207 = vector.load %arg11[%c0_46, %c0_47] : memref<64x32xbf16, #tpu.memory_space<vmem>>, vector<64x32xbf16>
    %cst_48 = arith.constant dense<0.000000e+00> : vector<8x32xf32>
    %208 = tpu.matmul %206, %207, %cst_48 {dimension_numbers = #tpu.dot_dimension_numbers<[1], [0], [0], [1], [0, 0, 1, 1], [], []>} : vector<8x64xbf16>, vector<64x32xbf16>, vector<8x32xf32> -> vector<8x32xf32>
    %209 = arith.addf %5, %208 : vector<8x32xf32>
    %210 = arith.truncf %209 : vector<8x32xf32> to vector<8x32xbf16>
    %c0_49 = arith.constant 0 : index
    %c0_50 = arith.constant 0 : index
    %c0_51 = arith.constant 0 : index
    %211 = vector.load %arg12[%c0_49, %c0_50, %c0_51] : memref<1x8x32xbf16, #tpu.memory_space<vmem>>, vector<1x8x32xbf16>
    %212 = vector.shape_cast %211 : vector<1x8x32xbf16> to vector<8x32xbf16>
    %213 = vector.shape_cast %210 : vector<8x32xbf16> to vector<1x8x32xbf16>
    tpu.vector_store %arg12[%c0_49, %c0_50, %c0_51], %213 {strides = array<i32>} : memref<1x8x32xbf16, #tpu.memory_space<vmem>>, vector<1x8x32xbf16>,
    return
  }
  func.func @transform_0(%arg0: i32, %arg1: i32) -> (i32, i32, i32) {
    %c0_i32 = arith.constant 0 : i32
    %c0_i32_0 = arith.constant 0 : i32
    return %arg0, %arg1, %c0_i32 : i32, i32, i32
  }
  func.func @transform_1(%arg0: i32, %arg1: i32) -> (i32, i32) {
    %c0_i32 = arith.constant 0 : i32
    %c0_i32_0 = arith.constant 0 : i32
    %c0_i32_1 = arith.constant 0 : i32
    return %c0_i32, %c0_i32_0 : i32, i32
  }
  func.func @transform_2(%arg0: i32, %arg1: i32) -> (i32, i32) {
    %c0_i32 = arith.constant 0 : i32
    %c0_i32_0 = arith.constant 0 : i32
    %c0_i32_1 = arith.constant 0 : i32
    return %c0_i32, %c0_i32_0 : i32, i32
  }
  func.func @transform_3(%arg0: i32, %arg1: i32) -> (i32, i32) {
    %c0_i32 = arith.constant 0 : i32
    %c0_i32_0 = arith.constant 0 : i32
    %c0_i32_1 = arith.constant 0 : i32
    return %c0_i32, %c0_i32_0 : i32, i32
  }
  func.func @transform_4(%arg0: i32, %arg1: i32) -> (i32, i32) {
    %c0_i32 = arith.constant 0 : i32
    %c0_i32_0 = arith.constant 0 : i32
    %c0_i32_1 = arith.constant 0 : i32
    return %c0_i32, %c0_i32_0 : i32, i32
  }
  func.func @transform_5(%arg0: i32, %arg1: i32) -> (i32, i32) {
    %c0_i32 = arith.constant 0 : i32
    %c0_i32_0 = arith.constant 0 : i32
    %c0_i32_1 = arith.constant 0 : i32
    return %c0_i32, %c0_i32_0 : i32, i32
  }
  func.func @transform_6(%arg0: i32, %arg1: i32) -> (i32, i32) {
    %c0_i32 = arith.constant 0 : i32
    %c0_i32_0 = arith.constant 0 : i32
    %c0_i32_1 = arith.constant 0 : i32
    return %c0_i32, %c0_i32_0 : i32, i32
  }
  func.func @transform_7(%arg0: i32, %arg1: i32) -> (i32, i32) {
    %c0_i32 = arith.constant 0 : i32
    %c0_i32_0 = arith.constant 0 : i32
    %c0_i32_1 = arith.constant 0 : i32
    return %c0_i32, %c0_i32_0 : i32, i32
  }
  func.func @transform_8(%arg0: i32, %arg1: i32) -> (i32, i32) {
    %c0_i32 = arith.constant 0 : i32
    %c0_i32_0 = arith.constant 0 : i32
    %c0_i32_1 = arith.constant 0 : i32
    return %c0_i32, %c0_i32_0 : i32, i32
  }
  func.func @transform_9(%arg0: i32, %arg1: i32) -> (i32, i32) {
    %c0_i32 = arith.constant 0 : i32
    %c0_i32_0 = arith.constant 0 : i32
    %c0_i32_1 = arith.constant 0 : i32
    return %c0_i32, %c0_i32_0 : i32, i32
  }
  func.func @transform_10(%arg0: i32, %arg1: i32) -> (i32, i32, i32) {
    %c0_i32 = arith.constant 0 : i32
    %c0_i32_0 = arith.constant 0 : i32
    return %arg0, %arg1, %c0_i32 : i32, i32, i32
  }
}

</mosaic_0001>

<llo_original>
// kernel: tpu_custom_call.1
$region0: #{tpu_custom_call.1}
  #allocation0 [shape = 'u32[]', space=smem, size = 0x4, offset = 0x4, fixed_abs, tag = 'smem constant byte address 0x4 - core index']
  #allocation1 [shape = 'u32[72,128]{1,0:T(1,128)}', space=vmem, size = 0x9000, scoped, tag = 'internal scratch']
  #allocation2 [shape = 'f32[1,1024]{1,0:T(1,128)}', space=vmem, size = 0x1000, scoped, tag = 'scratch operand']
  #allocation3 [shape = 'f32[3,64]{1,0:T(4,128)}', space=vmem, size = 0x800, scoped, tag = 'scratch operand']
  %s0 = inlined_call_operand.hbm [shape: bf16[2,8,32], index: 0, kind: input, shape index: {}]
  %s1 = inlined_call_operand.hbm [shape: f32[1,32], index: 1, kind: input, shape index: {}]
  %s2 = inlined_call_operand.vmem [shape: bf16[32,128], index: 2, kind: input, shape index: {}]
  %s3 = inlined_call_operand.vmem [shape: f32[4,64], index: 3, kind: input, shape index: {}]
  %s4 = inlined_call_operand.hbm [shape: f32[1,64], index: 4, kind: input, shape index: {}]
  %s5 = inlined_call_operand.vmem [shape: bf16[64,80], index: 5, kind: input, shape index: {}]
  %s6 = inlined_call_operand.vmem [shape: f32[1,64], index: 6, kind: input, shape index: {}]
  %s7 = inlined_call_operand.hbm [shape: f32[1,1024], index: 7, kind: input, shape index: {}]
  %s8 = inlined_call_operand.vmem [shape: f32[1,64], index: 8, kind: input, shape index: {}]
  %s9 = inlined_call_operand.vmem [shape: bf16[64,32], index: 9, kind: input, shape index: {}]
  %s10 = inlined_call_operand.hbm [shape: bf16[2,8,32], index: 10, kind: output, shape index: {}]
  %s11 = sld [smem:[#allocation0]]
  $region93: #{tpu_custom_call.1} parent=0
    _
  %s13 = ssub.s32 1, %s11
  %s14 = scalar_select 0, %s13, %s11
  $region1: #{tpu_custom_call.1} parent=0
    #allocation4 [shape = 'u8[4096]{0}', space=vmem, size = 0x1000, scoped, tag = 'input window, operand 0']
    #allocation5 [shape = 's32[2]{0}', space=sflag, size = 0x8, scoped, tag = 'scoped memory for tpu_custom_call.1']
    #allocation6 [shape = 's32[2]{0}', space=sflag, size = 0x8, scoped, tag = 'scoped memory for tpu_custom_call.1']
    #allocation7 [shape = 'u8[512]{0}', space=vmem, size = 0x400, scoped, tag = 'input window, operand 1, single buffered']
    #allocation8 [shape = 's32[1]{0}', space=sflag, size = 0x4, scoped, tag = 'scoped memory for tpu_custom_call.1']
    #allocation9 [shape = 'u8[512]{0}', space=vmem, size = 0x400, scoped, tag = 'input window, operand 4, single buffered']
    #allocation10 [shape = 'u8[4096]{0}', space=vmem, size = 0x1000, scoped, tag = 'input window, operand 7, single buffered']
    #allocation11 [shape = 's32[1]{0}', space=sflag, size = 0x4, scoped, tag = 'scoped memory for tpu_custom_call.1']
    #allocation12 [shape = 'u8[4096]{0}', space=vmem, size = 0x1000, scoped, tag = 'output window, operand 0']
    %15 = vsyncpa [#allocation5], 0
    %s16 = scalar_lea.sflag [#allocation5], 1
    %17 = vsyncpa %s16, 0
    %18 = vsyncpa [#allocation8], 0
    %19 = vsyncpa [#allocation11], 0
    %20 = vsyncpa [#allocation6], 0
    %s21 = scalar_lea.sflag [#allocation6], 1
    %22 = vsyncpa %s21, 0
    loop: start=0, step=1, limit=4
    $region2: #{tpu_custom_call.1} parent=1 // loop_pre_header
      _
    $region3: #{tpu_custom_call.1} parent=1 // loop_header
      %s24 = sphi 0, %s28
      %p25 = scmp.ge.s32.totalorder %s24, 4
      %s31 = sphi 0, %s43
      %s32 = sphi 0, %s39
      %s33 = sphi 0, %s31
      %s34 = sphi 0, %s32
      %s35 = sphi 0, %s33
      %s36 = sphi 0, %s34
      %s48 = sphi 0, %s50
      %s51 = sphi 0, %s48
      %s52 = sphi 0, %s51
      %s68 = sphi 0, %s52
      %s72 = sphi 0, %s72
      %s74 = sphi 0, %s72
      %s75 = sphi 0, %s74
      %s89 = sphi 0, %s75
      %s93 = sphi 0, %s93
      %s95 = sphi 0, %s93
      %s96 = sphi 0, %s95
      %s110 = sphi 0, %s96
      %s114 = sphi 0, %s114
      %s116 = sphi 0, %s114
      %s117 = sphi 0, %s116
      %s131 = sphi 0, %s117
      %s135 = sphi 0, %s135
      %s137 = sphi 0, %s135
      %s138 = sphi 0, %s137
      %s152 = sphi 0, %s138
      %s156 = sphi 0, %s156
      %s158 = sphi 0, %s156
      %s159 = sphi 0, %s158
      %s173 = sphi 0, %s159
      %s177 = sphi 0, %s177
      %s179 = sphi 0, %s177
      %s180 = sphi 0, %s179
      %s194 = sphi 0, %s180
      %s198 = sphi 0, %s198
      %s200 = sphi 0, %s198
      %s201 = sphi 0, %s200
      %s215 = sphi 0, %s201
      %s219 = sphi 0, %s219
      %s221 = sphi 0, %s219
      %s222 = sphi 0, %s221
      %s236 = sphi 0, %s222
      %s240 = sphi 0, %s240
      %s242 = sphi 0, %s240
      %s243 = sphi 0, %s242
      %s257 = sphi 0, %s243
      %s265 = sphi 0, %s267
      %s268 = sphi 0, %s265
      %s269 = sphi 0, %s268
      %s285 = sphi 0, %s269
    $region4: #{tpu_custom_call.1} parent=1 // loop_header_branch
      %27 = sbr.rel (%p25) target = $region8
    $region5: #{tpu_custom_call.1} parent=1 // loop_body
      %s29 = ssub.s32 %s24, 1
      %s30 = ssub.s32 %s24, 2
      %s37 = sadd.s32 1, %s32
      %p38 = scmp.ge.s32.totalorder %s37, 1
      %s39 = scalar_select %p38, 0, %s37
      %s40 = sadd.s32 1, %s31
      %s41 = scalar_select %p38, %s40, %s31
      %p42 = scmp.ge.s32.totalorder %s41, 2
      %s43 = scalar_select %p42, 0, %s41
      %s44 = ssub.s32 %s31, %s43
      %s45 = ssub.s32 %s32, %s39
      %s46 = sor.u32 %s44, %s45
      %p47 = scmp.eq.s32.totalorder %s46, 0
      %s49 = sadd.s32 %s48, 1
      %s50 = scalar_select %p47, %s48, %s49
      %p53 = pneg %p47
      %p54 = scmp.eq.s32.totalorder %s24, 1
      %p55 = por %p53, %p54
      %p56 = scmp.ne.s32.totalorder %s48, %s51
      %p57 = scmp.eq.s32.totalorder %s24, 0
      %p58 = por %p56, %p57
      %p59 = scmp.ne.s32.totalorder %s48, %s51
      %p60 = scmp.eq.s32.totalorder %s29, 1
      %p61 = por %p59, %p60
      %p62 = scmp.ne.s32.totalorder %s51, %s52
      %p63 = scmp.eq.s32.totalorder %s29, 0
      %p64 = por %p62, %p63
      %p65 = scmp.ne.s32.totalorder %s51, %s52
      %p66 = scmp.eq.s32.totalorder %s30, 1
      %p67 = por %p65, %p66
      %p69 = scmp.ne.s32.totalorder %s52, %s68
      %p70 = scmp.eq.s32.totalorder %s30, 0
      %p71 = por %p69, %p70
      %s73 = sadd.s32 %s72, 1
      %p76 = scmp.eq.s32.totalorder %s24, 1
      %p77 = scmp.ne.s32.totalorder %s72, %s74
      %p78 = scmp.eq.s32.totalorder %s24, 0
      %p79 = por %p77, %p78
      %p80 = scmp.ne.s32.totalorder %s72, %s74
      %p81 = scmp.eq.s32.totalorder %s29, 1
      %p82 = por %p80, %p81
      %p83 = scmp.ne.s32.totalorder %s74, %s75
      %p84 = scmp.eq.s32.totalorder %s29, 0
      %p85 = por %p83, %p84
      %p86 = scmp.ne.s32.totalorder %s74, %s75
      %p87 = scmp.eq.s32.totalorder %s30, 1
      %p88 = por %p86, %p87
      %p90 = scmp.ne.s32.totalorder %s75, %s89
      %p91 = scmp.eq.s32.totalorder %s30, 0
      %p92 = por %p90, %p91
      %s94 = sadd.s32 %s93, 1
      %p97 = scmp.eq.s32.totalorder %s24, 1
      %p98 = scmp.ne.s32.totalorder %s93, %s95
      %p99 = scmp.eq.s32.totalorder %s24, 0
      %p100 = por %p98, %p99
      %p101 = scmp.ne.s32.totalorder %s93, %s95
      %p102 = scmp.eq.s32.totalorder %s29, 1
      %p103 = por %p101, %p102
      %p104 = scmp.ne.s32.totalorder %s95, %s96
      %p105 = scmp.eq.s32.totalorder %s29, 0
      %p106 = por %p104, %p105
      %p107 = scmp.ne.s32.totalorder %s95, %s96
      %p108 = scmp.eq.s32.totalorder %s30, 1
      %p109 = por %p107, %p108
      %p111 = scmp.ne.s32.totalorder %s96, %s110
      %p112 = scmp.eq.s32.totalorder %s30, 0
      %p113 = por %p111, %p112
      %s115 = sadd.s32 %s114, 1
      %p118 = scmp.eq.s32.totalorder %s24, 1
      %p119 = scmp.ne.s32.totalorder %s114, %s116
      %p120 = scmp.eq.s32.totalorder %s24, 0
      %p121 = por %p119, %p120
      %p122 = scmp.ne.s32.totalorder %s114, %s116
      %p123 = scmp.eq.s32.totalorder %s29, 1
      %p124 = por %p122, %p123
      %p125 = scmp.ne.s32.totalorder %s116, %s117
      %p126 = scmp.eq.s32.totalorder %s29, 0
      %p127 = por %p125, %p126
      %p128 = scmp.ne.s32.totalorder %s116, %s117
      %p129 = scmp.eq.s32.totalorder %s30, 1
      %p130 = por %p128, %p129
      %p132 = scmp.ne.s32.totalorder %s117, %s131
      %p133 = scmp.eq.s32.totalorder %s30, 0
      %p134 = por %p132, %p133
      %s136 = sadd.s32 %s135, 1
      %p139 = scmp.eq.s32.totalorder %s24, 1
      %p140 = scmp.ne.s32.totalorder %s135, %s137
      %p141 = scmp.eq.s32.totalorder %s24, 0
      %p142 = por %p140, %p141
      %p143 = scmp.ne.s32.totalorder %s135, %s137
      %p144 = scmp.eq.s32.totalorder %s29, 1
      %p145 = por %p143, %p144
      %p146 = scmp.ne.s32.totalorder %s137, %s138
      %p147 = scmp.eq.s32.totalorder %s29, 0
      %p148 = por %p146, %p147
      %p149 = scmp.ne.s32.totalorder %s137, %s138
      %p150 = scmp.eq.s32.totalorder %s30, 1
      %p151 = por %p149, %p150
      %p153 = scmp.ne.s32.totalorder %s138, %s152
      %p154 = scmp.eq.s32.totalorder %s30, 0
      %p155 = por %p153, %p154
      %s157 = sadd.s32 %s156, 1
      %p160 = scmp.eq.s32.totalorder %s24, 1
      %p161 = scmp.ne.s32.totalorder %s156, %s158
      %p162 = scmp.eq.s32.totalorder %s24, 0
      %p163 = por %p161, %p162
      %p164 = scmp.ne.s32.totalorder %s156, %s158
      %p165 = scmp.eq.s32.totalorder %s29, 1
      %p166 = por %p164, %p165
      %p167 = scmp.ne.s32.totalorder %s158, %s159
      %p168 = scmp.eq.s32.totalorder %s29, 0
      %p169 = por %p167, %p168
      %p170 = scmp.ne.s32.totalorder %s158, %s159
      %p171 = scmp.eq.s32.totalorder %s30, 1
      %p172 = por %p170, %p171
      %p174 = scmp.ne.s32.totalorder %s159, %s173
      %p175 = scmp.eq.s32.totalorder %s30, 0
      %p176 = por %p174, %p175
      %s178 = sadd.s32 %s177, 1
      %p181 = scmp.eq.s32.totalorder %s24, 1
      %p182 = scmp.ne.s32.totalorder %s177, %s179
      %p183 = scmp.eq.s32.totalorder %s24, 0
      %p184 = por %p182, %p183
      %p185 = scmp.ne.s32.totalorder %s177, %s179
      %p186 = scmp.eq.s32.totalorder %s29, 1
      %p187 = por %p185, %p186
      %p188 = scmp.ne.s32.totalorder %s179, %s180
      %p189 = scmp.eq.s32.totalorder %s29, 0
      %p190 = por %p188, %p189
      %p191 = scmp.ne.s32.totalorder %s179, %s180
      %p192 = scmp.eq.s32.totalorder %s30, 1
      %p193 = por %p191, %p192
      %p195 = scmp.ne.s32.totalorder %s180, %s194
      %p196 = scmp.eq.s32.totalorder %s30, 0
      %p197 = por %p195, %p196
      %s199 = sadd.s32 %s198, 1
      %p202 = scmp.eq.s32.totalorder %s24, 1
      %p203 = scmp.ne.s32.totalorder %s198, %s200
      %p204 = scmp.eq.s32.totalorder %s24, 0
      %p205 = por %p203, %p204
      %p206 = scmp.ne.s32.totalorder %s198, %s200
      %p207 = scmp.eq.s32.totalorder %s29, 1
      %p208 = por %p206, %p207
      %p209 = scmp.ne.s32.totalorder %s200, %s201
      %p210 = scmp.eq.s32.totalorder %s29, 0
      %p211 = por %p209, %p210
      %p212 = scmp.ne.s32.totalorder %s200, %s201
      %p213 = scmp.eq.s32.totalorder %s30, 1
      %p214 = por %p212, %p213
      %p216 = scmp.ne.s32.totalorder %s201, %s215
      %p217 = scmp.eq.s32.totalorder %s30, 0
      %p218 = por %p216, %p217
      %s220 = sadd.s32 %s219, 1
      %p223 = scmp.eq.s32.totalorder %s24, 1
      %p224 = scmp.ne.s32.totalorder %s219, %s221
      %p225 = scmp.eq.s32.totalorder %s24, 0
      %p226 = por %p224, %p225
      %p227 = scmp.ne.s32.totalorder %s219, %s221
      %p228 = scmp.eq.s32.totalorder %s29, 1
      %p229 = por %p227, %p228
      %p230 = scmp.ne.s32.totalorder %s221, %s222
      %p231 = scmp.eq.s32.totalorder %s29, 0
      %p232 = por %p230, %p231
      %p233 = scmp.ne.s32.totalorder %s221, %s222
      %p234 = scmp.eq.s32.totalorder %s30, 1
      %p235 = por %p233, %p234
      %p237 = scmp.ne.s32.totalorder %s222, %s236
      %p238 = scmp.eq.s32.totalorder %s30, 0
      %p239 = por %p237, %p238
      %s241 = sadd.s32 %s240, 1
      %p244 = scmp.eq.s32.totalorder %s24, 1
      %p245 = scmp.ne.s32.totalorder %s240, %s242
      %p246 = scmp.eq.s32.totalorder %s24, 0
      %p247 = por %p245, %p246
      %p248 = scmp.ne.s32.totalorder %s240, %s242
      %p249 = scmp.eq.s32.totalorder %s29, 1
      %p250 = por %p248, %p249
      %p251 = scmp.ne.s32.totalorder %s242, %s243
      %p252 = scmp.eq.s32.totalorder %s29, 0
      %p253 = por %p251, %p252
      %p254 = scmp.ne.s32.totalorder %s242, %s243
      %p255 = scmp.eq.s32.totalorder %s30, 1
      %p256 = por %p254, %p255
      %p258 = scmp.ne.s32.totalorder %s243, %s257
      %p259 = scmp.eq.s32.totalorder %s30, 0
      %p260 = por %p258, %p259
      %s261 = ssub.s32 %s31, %s43
      %s262 = ssub.s32 %s32, %s39
      %s263 = sor.u32 %s261, %s262
      %p264 = scmp.eq.s32.totalorder %s263, 0
      %s266 = sadd.s32 %s265, 1
      %s267 = scalar_select %p264, %s265, %s266
      %p270 = pneg %p264
      %p271 = scmp.eq.s32.totalorder %s24, 1
      %p272 = por %p270, %p271
      %p273 = scmp.ne.s32.totalorder %s265, %s268
      %p274 = scmp.eq.s32.totalorder %s24, 0
      %p275 = por %p273, %p274
      %p276 = scmp.ne.s32.totalorder %s265, %s268
      %p277 = scmp.eq.s32.totalorder %s29, 1
      %p278 = por %p276, %p277
      %p279 = scmp.ne.s32.totalorder %s268, %s269
      %p280 = scmp.eq.s32.totalorder %s29, 0
      %p281 = por %p279, %p280
      %p282 = scmp.ne.s32.totalorder %s268, %s269
      %p283 = scmp.eq.s32.totalorder %s30, 1
      %p284 = por %p282, %p283
      %p286 = scmp.ne.s32.totalorder %s269, %s285
      %p287 = scmp.eq.s32.totalorder %s30, 0
      %p288 = por %p286, %p287
      %p289 = scmp.le.s32.totalorder 1, %s24
      %p290 = scmp.lt.s32.totalorder %s24, 3
      %p291 = pnand %p289, %p290
      %p292 = pneg %p291
      // Predicated region
      $region9: #{tpu_custom_call.1} parent=5 // pred_check
        _
      $region10: #{tpu_custom_call.1} parent=5 // pred_check_branch
        %294 = sbr.rel (%p291) target = $region12
      $region11: #{tpu_custom_call.1} parent=5 // pred_region
        %s295 = ssub.s32 %s24, 1
        // Predicated region
        $region13: #{tpu_custom_call.1} parent=11 // pred_check
          %p296 = pneg %p85
        $region14: #{tpu_custom_call.1} parent=11 // pred_check_branch
          %298 = sbr.rel (%p296) target = $region16
        $region15: #{tpu_custom_call.1} parent=11 // pred_region
          %300 = vsyncadd [#allocation8], 0
          %s302 = sshll.u32 %s1, 4
          %s303 = int_to_ptr.hbm [resolvable:$true] %s302
          %s304 = sshll.u32 [#allocation7], 4
          %s305 = int_to_ptr.vmem [resolvable:$true] %s304
          %307 = dma.hbm_to_vmem [thread:$0]  %s303, 16, %s305, [#allocation8]
        $region16: #{tpu_custom_call.1} parent=11 // pred_fallthru
          _
        // Predicated region
        $region17: #{tpu_custom_call.1} parent=11 // pred_check
          %p308 = pneg %p106
        $region18: #{tpu_custom_call.1} parent=11 // pred_check_branch
          %310 = sbr.rel (%p308) target = $region20
        $region19: #{tpu_custom_call.1} parent=11 // pred_region
          _
        $region20: #{tpu_custom_call.1} parent=11 // pred_fallthru
          _
        // Predicated region
        $region21: #{tpu_custom_call.1} parent=11 // pred_check
          %p311 = pneg %p127
        $region22: #{tpu_custom_call.1} parent=11 // pred_check_branch
          %313 = sbr.rel (%p311) target = $region24
        $region23: #{tpu_custom_call.1} parent=11 // pred_region
          _
        $region24: #{tpu_custom_call.1} parent=11 // pred_fallthru
          _
        // Predicated region
        $region25: #{tpu_custom_call.1} parent=11 // pred_check
          %p314 = pneg %p148
        $region26: #{tpu_custom_call.1} parent=11 // pred_check_branch
          %316 = sbr.rel (%p314) target = $region28
        $region27: #{tpu_custom_call.1} parent=11 // pred_region
          %318 = vsyncadd [#allocation8], 0
          %s320 = sshll.u32 %s4, 4
          %s321 = int_to_ptr.hbm [resolvable:$true] %s320
          %s322 = sshll.u32 [#allocation9], 4
          %s323 = int_to_ptr.vmem [resolvable:$true] %s322
          %325 = dma.hbm_to_vmem [thread:$0]  %s321, 16, %s323, [#allocation8]
        $region28: #{tpu_custom_call.1} parent=11 // pred_fallthru
          _
        // Predicated region
        $region29: #{tpu_custom_call.1} parent=11 // pred_check
          %p326 = pneg %p169
        $region30: #{tpu_custom_call.1} parent=11 // pred_check_branch
          %328 = sbr.rel (%p326) target = $region32
        $region31: #{tpu_custom_call.1} parent=11 // pred_region
          _
        $region32: #{tpu_custom_call.1} parent=11 // pred_fallthru
          _
        // Predicated region
        $region33: #{tpu_custom_call.1} parent=11 // pred_check
          %p329 = pneg %p190
        $region34: #{tpu_custom_call.1} parent=11 // pred_check_branch
          %331 = sbr.rel (%p329) target = $region36
        $region35: #{tpu_custom_call.1} parent=11 // pred_region
          _
        $region36: #{tpu_custom_call.1} parent=11 // pred_fallthru
          _
        // Predicated region
        $region37: #{tpu_custom_call.1} parent=11 // pred_check
          %p332 = pneg %p211
        $region38: #{tpu_custom_call.1} parent=11 // pred_check_branch
          %334 = sbr.rel (%p332) target = $region40
        $region39: #{tpu_custom_call.1} parent=11 // pred_region
          %336 = vsyncadd [#allocation11], 0
          %s338 = sshll.u32 %s7, 4
          %s339 = int_to_ptr.hbm [resolvable:$true] %s338
          %s340 = sshll.u32 [#allocation10], 4
          %s341 = int_to_ptr.vmem [resolvable:$true] %s340
          %343 = dma.hbm_to_vmem [thread:$0]  %s339, 128, %s341, [#allocation11]
        $region40: #{tpu_custom_call.1} parent=11 // pred_fallthru
          _
        // Predicated region
        $region41: #{tpu_custom_call.1} parent=11 // pred_check
          %p344 = pneg %p232
        $region42: #{tpu_custom_call.1} parent=11 // pred_check_branch
          %346 = sbr.rel (%p344) target = $region44
        $region43: #{tpu_custom_call.1} parent=11 // pred_region
          _
        $region44: #{tpu_custom_call.1} parent=11 // pred_fallthru
          _
        // Predicated region
        $region45: #{tpu_custom_call.1} parent=11 // pred_check
          %p347 = pneg %p253
        $region46: #{tpu_custom_call.1} parent=11 // pred_check_branch
          %349 = sbr.rel (%p347) target = $region48
        $region47: #{tpu_custom_call.1} parent=11 // pred_region
          _
        $region48: #{tpu_custom_call.1} parent=11 // pred_fallthru
          _
      $region12: #{tpu_custom_call.1} parent=5 // pred_fallthru
        _
      %p350 = scmp.lt.s32.totalorder %s24, 2
      // Predicated region
      $region49: #{tpu_custom_call.1} parent=5 // pred_check
        %p351 = pneg %p350
      $region50: #{tpu_custom_call.1} parent=5 // pred_check_branch
        %353 = sbr.rel (%p351) target = $region52
      $region51: #{tpu_custom_call.1} parent=5 // pred_region
        // Predicated region
        $region53: #{tpu_custom_call.1} parent=51 // pred_check
          %p354 = pneg %p58
        $region54: #{tpu_custom_call.1} parent=51 // pred_check_branch
          %356 = sbr.rel (%p354) target = $region56
        $region55: #{tpu_custom_call.1} parent=51 // pred_region
          %s357 = sand.u32 %s48, 1
          %s358 = scalar_lea.sflag [#allocation5], %s357
          %s359 = sand.u32 %s48, 1
          %s360 = smul.addr %s359, 4
          %s361 = scalar_lea.vmem [#allocation4], %s360
          %363 = vsyncadd %s358, 0
          %s364 = sadd.s32 %s32, %s31
          %s365 = smul.addr %s364, 4
          %s366 = scalar_lea.hbm %s0, %s365
          %s368 = sshll.u32 %s366, 4
          %s369 = int_to_ptr.hbm [resolvable:$true] %s368
          %s370 = sshll.u32 %s361, 4
          %s371 = int_to_ptr.vmem [resolvable:$true] %s370
          %373 = dma.hbm_to_vmem [thread:$0]  %s369, 64, %s371, %s358
        $region56: #{tpu_custom_call.1} parent=51 // pred_fallthru
          _
      $region52: #{tpu_custom_call.1} parent=5 // pred_fallthru
        _
      %p374 = scmp.le.s32.totalorder 1, %s24
      %p375 = scmp.lt.s32.totalorder %s24, 3
      %p376 = pnand %p374, %p375
      %p377 = pneg %p376
      // Predicated region
      $region57: #{tpu_custom_call.1} parent=5 // pred_check
        _
      $region58: #{tpu_custom_call.1} parent=5 // pred_check_branch
        %379 = sbr.rel (%p376) target = $region60
      $region59: #{tpu_custom_call.1} parent=5 // pred_region
        %s380 = ssub.s32 %s24, 1
        %s381 = sand.u32 %s51, 1
        %s382 = scalar_lea.sflag [#allocation5], %s381
        %s383 = sand.u32 %s51, 1
        %s384 = smul.addr %s383, 4
        %s385 = scalar_lea.vmem [#allocation4], %s384
        // Predicated region
        $region61: #{tpu_custom_call.1} parent=59 // pred_check
          %p386 = pneg %p64
        $region62: #{tpu_custom_call.1} parent=59 // pred_check_branch
          %388 = sbr.rel (%p386) target = $region64
        $region63: #{tpu_custom_call.1} parent=59 // pred_region
          %390 = dma.done %s382, 64
        $region64: #{tpu_custom_call.1} parent=59 // pred_fallthru
          _
        // Predicated region
        $region65: #{tpu_custom_call.1} parent=59 // pred_check
          %p391 = pneg %p85
        $region66: #{tpu_custom_call.1} parent=59 // pred_check_branch
          %393 = sbr.rel (%p391) target = $region68
        $region67: #{tpu_custom_call.1} parent=59 // pred_region
          %395 = dma.done [#allocation8], 16
        $region68: #{tpu_custom_call.1} parent=59 // pred_fallthru
          _
        // Predicated region
        $region69: #{tpu_custom_call.1} parent=59 // pred_check
          %p396 = pneg %p148
        $region70: #{tpu_custom_call.1} parent=59 // pred_check_branch
          %398 = sbr.rel (%p396) target = $region72
        $region71: #{tpu_custom_call.1} parent=59 // pred_region
          %400 = dma.done [#allocation8], 16
        $region72: #{tpu_custom_call.1} parent=59 // pred_fallthru
          _
        // Predicated region
        $region73: #{tpu_custom_call.1} parent=59 // pred_check
          %p401 = pneg %p211
        $region74: #{tpu_custom_call.1} parent=59 // pred_check_branch
          %403 = sbr.rel (%p401) target = $region76
        $region75: #{tpu_custom_call.1} parent=59 // pred_region
          %405 = dma.done [#allocation11], 128
        $region76: #{tpu_custom_call.1} parent=59 // pred_fallthru
          _
        %s406 = sand.u32 %s51, 1
        %s407 = scalar_lea.sflag [#allocation5], %s406
        %s408 = sand.u32 %s51, 1
        %s409 = smul.addr %s408, 4
        %s410 = scalar_lea.vmem [#allocation4], %s409
        %p411 = pneg %p64
        %p412 = pneg %p61
        %p413 = pneg %p85
        %p414 = pneg %p82
        %p415 = pneg %p106
        %p416 = pneg %p103
        %p417 = pneg %p127
        %p418 = pneg %p124
        %p419 = pneg %p148
        %p420 = pneg %p145
        %p421 = pneg %p169
        %p422 = pneg %p166
        %p423 = pneg %p190
        %p424 = pneg %p187
        %p425 = pneg %p211
        %p426 = pneg %p208
        %p427 = pneg %p232
        %p428 = pneg %p229
        %p429 = pneg %p253
        %p430 = pneg %p250
        %p431 = pneg %p281
        %p432 = pneg %p278
        %s433 = sand.u32 %s268, 1
        %s434 = scalar_lea.sflag [#allocation6], %s433
        %s435 = sand.u32 %s268, 1
        %s436 = smul.addr %s435, 4
        %s437 = scalar_lea.vmem [#allocation12], %s436
        %p439 = scmp.eq.s32.totalorder %s34, 0
        // Predicated region
        $region77: #{tpu_custom_call.1} parent=59 // pred_check
          %p440 = pneg %p439
        $region78: #{tpu_custom_call.1} parent=59 // pred_check_branch
          %442 = sbr.rel (%p440) target = $region80
        $region79: #{tpu_custom_call.1} parent=59 // pred_region
          %443 = vst [vmem:[#allocation2] sm:$0xff] 0.0
          %vm444 = vcmask 518144
          %445 = vst.msk [vmem:[#allocation3] sm:$0x7] %vm444, 0.0
        $region80: #{tpu_custom_call.1} parent=59 // pred_fallthru
          _
        %v446 = vld [vmem:[%s385] sm:$0xf]
        %v447 = vunpack.c.l.bf16 %v446
        %v448 = vld [vmem:[#allocation7] sm:$0x1]
        %v449 = vmul.f32 %v447, %v447
        %vm450 = vcmask 261120
        %v451 = vsel %vm450, %v449, 0.0
        %452 = vadd.xlane.f32.xlu0 %v451
        %v453 = vpop.xlane.xlu0 %452
        %v454 = vrcp.pop 32.0
        %v455 = vmul.f32 32.0, %v454
        %v456 = vsub.f32 1.0, %v455
        %v457 = vmul.f32 %v454, %v456
        %v458 = vadd.f32 %v454, %v457
        %vm459 = vweird.f32 %v454
        %v460 = vsel %vm459, %v454, %v458
        %v461 = vmul.f32 %v453, %v460
        %v462 = vadd.f32 %v461, 1.1920929e-07
        %v463 = vrsqrt.pop %v462
        %v464 = vmul.f32 %v463, %v462
        %v465 = vmul.f32 %v464, %v463
        %v466 = vmul.f32 0.5, %v465
        %v467 = vsub.f32 1.5, %v466
        %v468 = vmul.f32 %v463, %v467
        %vm469 = vweird.f32 %v462
        %vm470 = vweird.f32 %v463
        %vm471 = vmor %vm469, %vm470
        %v472 = vsel %vm471, %v463, %v468
        %v473 = vmul.f32 %v447, %v472
        %v475 = vperm.slane %v448, 0
        %v477 = vmul.f32 %v473, %v475
        %v478 = vpack.c.bf16 %v477, %v477
        %v479 = vld [vmem:[%s2] sm:$0xf]
        %v480 = vld [vmem:[%s2 + $0x4] sm:$0xf]
        %v481 = vld [vmem:[%s2 + $0x8] sm:$0xf]
        %v482 = vld [vmem:[%s2 + $0xc] sm:$0xf]
        %v487 = vunpack.c.l.b16 %v479
        %v488 = vunpack.c.l.b16 %v480
        %v489 = vunpack.c.l.b16 %v481
        %v490 = vunpack.c.l.b16 %v482
        %v491 = vpack.c.b16 %v488, %v487
        %v492 = vpack.c.b16 %v490, %v489
        %v496 = vsel %vm450, %v478, 0
        %498 = vmatpush.bf16.msra.mxu0 0
        %499 = vmatpush.bf16.msra.mxu0 0
        %500 = vmatpush.bf16.msra.mxu0 0
        %501 = vmatpush.bf16.msra.mxu0 0
        %502 = vmatpush.bf16.msra.mxu0 0
        %503 = vmatpush.bf16.msra.mxu0 0
        %504 = vmatpush.bf16.msra.mxu0 %v492
        %505 = vmatpush.bf16.msra.mxu0 %v491
        %506 = vmatmul.bf16.gmra.mxu0 %v496
        %v507 = vpop.f32.mrf.mxu0
        %v508 = vadd.f32 0.0, %v507
        %v509 = vpop.f32.mrf.mxu0
        %510 = vdwg.mxu0
        %v511 = vld [vmem:[#allocation3] sm:$0x7]
        %v513 = vrot.slane %v508, 5
        %vm515 = vcmask 1042432
        %v516 = vsel %vm515, %v511, %v513
        %v517 = vld [vmem:[%s3] sm:$0x1]
        %v518 = vperm.slane %v517, 0
        %v519 = vmul.f32 %v518, %v516
        %v520 = vadd.f32 %v519, 0.0
        %v521 = vld [vmem:[%s3 + $0x1] sm:$0x1]
        %v522 = vperm.slane %v521, 0
        %v523 = vmul.f32 %v522, %v516
        %v524 = vmul.f32 %v522, %v513
        %vm527 = vcmask 1046528
        %v528 = vrot.slane %v523, 1
        %v529 = vrot.slane %v524, 1
        %v530 = vsel %vm527, %v528, %v529
        %v532 = vadd.f32 %v520, %v530
        %v533 = vld [vmem:[%s3 + $0x2] sm:$0x1]
        %v534 = vperm.slane %v533, 0
        %v535 = vmul.f32 %v534, %v516
        %v536 = vmul.f32 %v534, %v513
        %vm539 = vcmask 1045504
        %v540 = vrot.slane %v535, 2
        %v541 = vrot.slane %v536, 2
        %v542 = vsel %vm539, %v540, %v541
        %v544 = vadd.f32 %v532, %v542
        %v545 = vld [vmem:[%s3 + $0x3] sm:$0x1]
        %v546 = vperm.slane %v545, 0
        %v547 = vmul.f32 %v546, %v516
        %v548 = vmul.f32 %v546, %v513
        %vm551 = vcmask 1044480
        %v552 = vrot.slane %v547, 3
        %v553 = vrot.slane %v548, 3
        %v554 = vsel %vm551, %v552, %v553
        %v556 = vadd.f32 %v544, %v554
        %vm557 = vcmask 518144
        %558 = vst.msk [vmem:[#allocation3] sm:$0x7] %vm557, %v513
        %v559 = vld [vmem:[#allocation9] sm:$0x1]
        %v561 = vperm.slane %v559, 0
        %v563 = vadd.f32 %v556, %v561
        %v564 = vxor.u32 %v563, 2147483648
        %v565 = vmul.f32 %v564, 1.442695
        %v566 = vpow.pop %v565
        %v567 = vadd.f32 %v566, 1.0
        %v568 = vrcp.pop %v567
        %v569 = vmul.f32 %v567, %v568
        %v570 = vsub.f32 1.0, %v569
        %v571 = vmul.f32 %v568, %v570
        %v572 = vadd.f32 %v568, %v571
        %vm573 = vweird.f32 %v567
        %vm574 = vweird.f32 %v568
        %vm575 = vmor %vm573, %vm574
        %v576 = vsel %vm575, %v568, %v572
        %v577 = vand.u32 2147483647, %v567
        %vm578 = vcmp.eq.f32.partialorder %v577, 8.507059e+37
        %v579 = vand.u32 %v567, 2147483648
        %v580 = vor.u32 1.1754944e-38, %v579
        %v581 = vsel %vm578, %v580, %v576
        %v582 = vmul.f32 1.0, %v581
        %v583 = vmul.f32 %v563, %v582
        %v584 = vpack.c.bf16 %v583, %v583
        %v585 = vld [vmem:[%s5] sm:$0xf]
        %v586 = vld [vmem:[%s5 + $0x4] sm:$0xf]
        %v587 = vld [vmem:[%s5 + $0x8] sm:$0xf]
        %v588 = vld [vmem:[%s5 + $0xc] sm:$0xf]
        %v589 = vld [vmem:[%s5 + $0x10] sm:$0xf]
        %v590 = vld [vmem:[%s5 + $0x14] sm:$0xf]
        %v591 = vld [vmem:[%s5 + $0x18] sm:$0xf]
        %v592 = vld [vmem:[%s5 + $0x1c] sm:$0xf]
        %v601 = vunpack.c.l.b16 %v585
        %v602 = vunpack.c.l.b16 %v586
        %v603 = vunpack.c.l.b16 %v587
        %v604 = vunpack.c.l.b16 %v588
        %v605 = vunpack.c.l.b16 %v589
        %v606 = vunpack.c.l.b16 %v590
        %v607 = vunpack.c.l.b16 %v591
        %v608 = vunpack.c.l.b16 %v592
        %v609 = vpack.c.b16 %v602, %v601
        %v610 = vpack.c.b16 %v604, %v603
        %v611 = vpack.c.b16 %v606, %v605
        %v612 = vpack.c.b16 %v608, %v607
        %vm617 = vcmask 523264
        %v619 = vsel %vm617, %v584, 0
        %621 = vmatpush.bf16.msra.mxu0 0
        %622 = vmatpush.bf16.msra.mxu0 0
        %623 = vmatpush.bf16.msra.mxu0 0
        %624 = vmatpush.bf16.msra.mxu0 0
        %625 = vmatpush.bf16.msra.mxu0 %v612
        %626 = vmatpush.bf16.msra.mxu0 %v611
        %627 = vmatpush.bf16.msra.mxu0 %v610
        %628 = vmatpush.bf16.msra.mxu0 %v609
        %629 = vmatmul.bf16.gmra.mxu0 %v619
        %v630 = vpop.f32.mrf.mxu0
        %v631 = vadd.f32 0.0, %v630
        %v632 = vpop.f32.mrf.mxu0
        %633 = vdwg.mxu0
        %v634 = vld [vmem:[%s6] sm:$0x1]
        %v636 = vperm.slane %v634, 0
        %v638 = vadd.f32 %v631, %v636
        %vm639 = vcmp.gt.f32.partialorder %v638, 20.0
        %v640 = vmin.f32 %v638, 20.0
        %v641 = vmul.f32 %v640, 1.442695
        %v642 = vpow.pop %v641
        %v643 = vadd.f32 %v642, 1.0
        %v644 = vlog2.pop %v643
        %v645 = vmul.f32 %v644, 0.6931472
        %v646 = vmul.f32 -0.5, %v642
        %v647 = vadd.f32 %v646, 1.0
        %v648 = vmul.f32 %v647, %v642
        %v649 = vand.u32 2147483647, %v642
        %vm650 = vcmp.lt.f32.partialorder %v649, 0.0004427343
        %v651 = vsel %vm650, %v648, %v645
        %v652 = vsel %vm639, %v638, %v651
        %v653 = vld [vmem:[#allocation10] sm:$0xff]
        %v654 = vmul.f32 %v653, 1.442695
        %v655 = vpow.pop %v654
        %v656 = vsub.f32 0.0, %v655
        %v657 = vmul.f32 %v652, %v583
        %659 = vrot.lane.b32.xlu0 %v652, 64
        %v660 = vpop.permute.xlu0 %659
        %v662 = vsel %vm617, %v652, %v660
        %v664 = vperm.slane %v656, 0
        %v665 = vperm.slane %v656, 1
        %v666 = vperm.slane %v656, 2
        %v667 = vperm.slane %v656, 3
        %v668 = vperm.slane %v656, 4
        %v669 = vperm.slane %v656, 5
        %v670 = vperm.slane %v656, 6
        %v671 = vperm.slane %v656, 7
        %v680 = vmul.f32 %v662, %v664
        %v681 = vmul.f32 %v662, %v665
        %v682 = vmul.f32 %v662, %v666
        %v683 = vmul.f32 %v662, %v667
        %v684 = vmul.f32 %v662, %v668
        %v685 = vmul.f32 %v662, %v669
        %v686 = vmul.f32 %v662, %v670
        %v687 = vmul.f32 %v662, %v671
        %v688 = vmul.f32 %v680, 1.442695
        %v689 = vpow.pop %v688
        %v690 = vmul.f32 %v681, 1.442695
        %v691 = vpow.pop %v690
        %v692 = vmul.f32 %v682, 1.442695
        %v693 = vpow.pop %v692
        %v694 = vmul.f32 %v683, 1.442695
        %v695 = vpow.pop %v694
        %v696 = vmul.f32 %v684, 1.442695
        %v697 = vpow.pop %v696
        %v698 = vmul.f32 %v685, 1.442695
        %v699 = vpow.pop %v698
        %v700 = vmul.f32 %v686, 1.442695
        %v701 = vpow.pop %v700
        %v702 = vmul.f32 %v687, 1.442695
        %v703 = vpow.pop %v702
        %705 = vset.pattern.permute.xlu0 64
        %706 = vperm.xlu0 %705, %v631
        %v707 = vpop.permute.xlu0 %706
        %v709 = vmul.f32 %v707, %v657
        %710 = vset.pattern.permute.xlu0 65
        %711 = vperm.xlu0 %710, %v631
        %v712 = vpop.permute.xlu0 %711
        %v714 = vmul.f32 %v712, %v657
        %715 = vset.pattern.permute.xlu0 66
        %716 = vperm.xlu0 %715, %v631
        %v717 = vpop.permute.xlu0 %716
        %v719 = vmul.f32 %v717, %v657
        %720 = vset.pattern.permute.xlu0 67
        %721 = vperm.xlu0 %720, %v631
        %v722 = vpop.permute.xlu0 %721
        %v724 = vmul.f32 %v722, %v657
        %725 = vset.pattern.permute.xlu0 68
        %726 = vperm.xlu0 %725, %v631
        %v727 = vpop.permute.xlu0 %726
        %v729 = vmul.f32 %v727, %v657
        %730 = vset.pattern.permute.xlu0 69
        %731 = vperm.xlu0 %730, %v631
        %v732 = vpop.permute.xlu0 %731
        %v734 = vmul.f32 %v732, %v657
        %735 = vset.pattern.permute.xlu0 70
        %736 = vperm.xlu0 %735, %v631
        %v737 = vpop.permute.xlu0 %736
        %v739 = vmul.f32 %v737, %v657
        %740 = vset.pattern.permute.xlu0 71
        %741 = vperm.xlu0 %740, %v631
        %v742 = vpop.permute.xlu0 %741
        %v744 = vmul.f32 %v742, %v657
        %745 = vset.pattern.permute.xlu0 72
        %746 = vperm.xlu0 %745, %v631
        %v747 = vpop.permute.xlu0 %746
        %v749 = vmul.f32 %v747, %v657
        %750 = vset.pattern.permute.xlu0 73
        %751 = vperm.xlu0 %750, %v631
        %v752 = vpop.permute.xlu0 %751
        %v754 = vmul.f32 %v752, %v657
        %755 = vset.pattern.permute.xlu0 74
        %756 = vperm.xlu0 %755, %v631
        %v757 = vpop.permute.xlu0 %756
        %v759 = vmul.f32 %v757, %v657
        %760 = vset.pattern.permute.xlu0 75
        %761 = vperm.xlu0 %760, %v631
        %v762 = vpop.permute.xlu0 %761
        %v764 = vmul.f32 %v762, %v657
        %765 = vset.pattern.permute.xlu0 76
        %766 = vperm.xlu0 %765, %v631
        %v767 = vpop.permute.xlu0 %766
        %v769 = vmul.f32 %v767, %v657
        %770 = vset.pattern.permute.xlu0 77
        %771 = vperm.xlu0 %770, %v631
        %v772 = vpop.permute.xlu0 %771
        %v774 = vmul.f32 %v772, %v657
        %775 = vset.pattern.permute.xlu0 78
        %776 = vperm.xlu0 %775, %v631
        %v777 = vpop.permute.xlu0 %776
        %v779 = vmul.f32 %v777, %v657
        %780 = vset.pattern.permute.xlu0 79
        %781 = vperm.xlu0 %780, %v631
        %v782 = vpop.permute.xlu0 %781
        %v784 = vmul.f32 %v782, %v657
        %786 = vrot.lane.b32.xlu0 %v714, 64
        %v787 = vpop.permute.xlu0 %786
        %790 = vrot.lane.b32.xlu0 %v724, 64
        %v791 = vpop.permute.xlu0 %790
        %794 = vrot.lane.b32.xlu0 %v734, 64
        %v795 = vpop.permute.xlu0 %794
        %798 = vrot.lane.b32.xlu0 %v744, 64
        %v799 = vpop.permute.xlu0 %798
        %802 = vrot.lane.b32.xlu0 %v754, 64
        %v803 = vpop.permute.xlu0 %802
        %806 = vrot.lane.b32.xlu0 %v764, 64
        %v807 = vpop.permute.xlu0 %806
        %810 = vrot.lane.b32.xlu0 %v774, 64
        %v811 = vpop.permute.xlu0 %810
        %814 = vrot.lane.b32.xlu0 %v784, 64
        %v815 = vpop.permute.xlu0 %814
        %v817 = vsel %vm617, %v709, %v787
        %v818 = vsel %vm617, %v719, %v791
        %v819 = vsel %vm617, %v729, %v795
        %v820 = vsel %vm617, %v739, %v799
        %v821 = vsel %vm617, %v749, %v803
        %v822 = vsel %vm617, %v759, %v807
        %v823 = vsel %vm617, %v769, %v811
        %v824 = vsel %vm617, %v779, %v815
        %v833 = vrot.slane %v689, 7
        %v834 = vrot.slane %v691, 7
        %v835 = vrot.slane %v693, 7
        %v836 = vrot.slane %v695, 7
        %v837 = vrot.slane %v697, 7
        %v838 = vrot.slane %v699, 7
        %v839 = vrot.slane %v701, 7
        %v840 = vrot.slane %v703, 7
        %vm849 = vcmask 1040384
        %v850 = vsel %vm849, 1.0, %v833
        %v851 = vsel %vm849, 1.0, %v834
        %v852 = vsel %vm849, 1.0, %v835
        %v853 = vsel %vm849, 1.0, %v836
        %v854 = vsel %vm849, 1.0, %v837
        %v855 = vsel %vm849, 1.0, %v838
        %v856 = vsel %vm849, 1.0, %v839
        %v857 = vsel %vm849, 1.0, %v840
        %v866 = vrot.slane %v817, 7
        %v867 = vrot.slane %v818, 7
        %v868 = vrot.slane %v819, 7
        %v869 = vrot.slane %v820, 7
        %v870 = vrot.slane %v821, 7
        %v871 = vrot.slane %v822, 7
        %v872 = vrot.slane %v823, 7
        %v873 = vrot.slane %v824, 7
        %v882 = vsel %vm849, 0.0, %v866
        %v883 = vsel %vm849, 0.0, %v867
        %v884 = vsel %vm849, 0.0, %v868
        %v885 = vsel %vm849, 0.0, %v869
        %v886 = vsel %vm849, 0.0, %v870
        %v887 = vsel %vm849, 0.0, %v871
        %v888 = vsel %vm849, 0.0, %v872
        %v889 = vsel %vm849, 0.0, %v873
        %v890 = vmul.f32 %v689, %v882
        %v891 = vmul.f32 %v691, %v883
        %v892 = vmul.f32 %v693, %v884
        %v893 = vmul.f32 %v695, %v885
        %v894 = vmul.f32 %v697, %v886
        %v895 = vmul.f32 %v699, %v887
        %v896 = vmul.f32 %v701, %v888
        %v897 = vmul.f32 %v703, %v889
        %v898 = vadd.f32 %v890, %v817
        %v899 = vadd.f32 %v891, %v818
        %v900 = vadd.f32 %v892, %v819
        %v901 = vadd.f32 %v893, %v820
        %v902 = vadd.f32 %v894, %v821
        %v903 = vadd.f32 %v895, %v822
        %v904 = vadd.f32 %v896, %v823
        %v905 = vadd.f32 %v897, %v824
        %v906 = vmul.f32 %v689, %v850
        %v907 = vmul.f32 %v691, %v851
        %v908 = vmul.f32 %v693, %v852
        %v909 = vmul.f32 %v695, %v853
        %v910 = vmul.f32 %v697, %v854
        %v911 = vmul.f32 %v699, %v855
        %v912 = vmul.f32 %v701, %v856
        %v913 = vmul.f32 %v703, %v857
        %v922 = vrot.slane %v906, 6
        %v923 = vrot.slane %v907, 6
        %v924 = vrot.slane %v908, 6
        %v925 = vrot.slane %v909, 6
        %v926 = vrot.slane %v910, 6
        %v927 = vrot.slane %v911, 6
        %v928 = vrot.slane %v912, 6
        %v929 = vrot.slane %v913, 6
        %vm938 = vcmask 1041408
        %v939 = vsel %vm938, 1.0, %v922
        %v940 = vsel %vm938, 1.0, %v923
        %v941 = vsel %vm938, 1.0, %v924
        %v942 = vsel %vm938, 1.0, %v925
        %v943 = vsel %vm938, 1.0, %v926
        %v944 = vsel %vm938, 1.0, %v927
        %v945 = vsel %vm938, 1.0, %v928
        %v946 = vsel %vm938, 1.0, %v929
        %v955 = vrot.slane %v898, 6
        %v956 = vrot.slane %v899, 6
        %v957 = vrot.slane %v900, 6
        %v958 = vrot.slane %v901, 6
        %v959 = vrot.slane %v902, 6
        %v960 = vrot.slane %v903, 6
        %v961 = vrot.slane %v904, 6
        %v962 = vrot.slane %v905, 6
        %v971 = vsel %vm938, 0.0, %v955
        %v972 = vsel %vm938, 0.0, %v956
        %v973 = vsel %vm938, 0.0, %v957
        %v974 = vsel %vm938, 0.0, %v958
        %v975 = vsel %vm938, 0.0, %v959
        %v976 = vsel %vm938, 0.0, %v960
        %v977 = vsel %vm938, 0.0, %v961
        %v978 = vsel %vm938, 0.0, %v962
        %v979 = vmul.f32 %v906, %v971
        %v980 = vmul.f32 %v907, %v972
        %v981 = vmul.f32 %v908, %v973
        %v982 = vmul.f32 %v909, %v974
        %v983 = vmul.f32 %v910, %v975
        %v984 = vmul.f32 %v911, %v976
        %v985 = vmul.f32 %v912, %v977
        %v986 = vmul.f32 %v913, %v978
        %v987 = vadd.f32 %v979, %v898
        %v988 = vadd.f32 %v980, %v899
        %v989 = vadd.f32 %v981, %v900
        %v990 = vadd.f32 %v982, %v901
        %v991 = vadd.f32 %v983, %v902
        %v992 = vadd.f32 %v984, %v903
        %v993 = vadd.f32 %v985, %v904
        %v994 = vadd.f32 %v986, %v905
        %v995 = vmul.f32 %v906, %v939
        %v996 = vmul.f32 %v907, %v940
        %v997 = vmul.f32 %v908, %v941
        %v998 = vmul.f32 %v909, %v942
        %v999 = vmul.f32 %v910, %v943
        %v1000 = vmul.f32 %v911, %v944
        %v1001 = vmul.f32 %v912, %v945
        %v1002 = vmul.f32 %v913, %v946
        %v1011 = vrot.slane %v995, 4
        %v1012 = vrot.slane %v996, 4
        %v1013 = vrot.slane %v997, 4
        %v1014 = vrot.slane %v998, 4
        %v1015 = vrot.slane %v999, 4
        %v1016 = vrot.slane %v1000, 4
        %v1017 = vrot.slane %v1001, 4
        %v1018 = vrot.slane %v1002, 4
        %vm1027 = vcmask 1043456
        %v1028 = vsel %vm1027, 1.0, %v1011
        %v1029 = vsel %vm1027, 1.0, %v1012
        %v1030 = vsel %vm1027, 1.0, %v1013
        %v1031 = vsel %vm1027, 1.0, %v1014
        %v1032 = vsel %vm1027, 1.0, %v1015
        %v1033 = vsel %vm1027, 1.0, %v1016
        %v1034 = vsel %vm1027, 1.0, %v1017
        %v1035 = vsel %vm1027, 1.0, %v1018
        %v1044 = vrot.slane %v987, 4
        %v1045 = vrot.slane %v988, 4
        %v1046 = vrot.slane %v989, 4
        %v1047 = vrot.slane %v990, 4
        %v1048 = vrot.slane %v991, 4
        %v1049 = vrot.slane %v992, 4
        %v1050 = vrot.slane %v993, 4
        %v1051 = vrot.slane %v994, 4
        %v1060 = vsel %vm1027, 0.0, %v1044
        %v1061 = vsel %vm1027, 0.0, %v1045
        %v1062 = vsel %vm1027, 0.0, %v1046
        %v1063 = vsel %vm1027, 0.0, %v1047
        %v1064 = vsel %vm1027, 0.0, %v1048
        %v1065 = vsel %vm1027, 0.0, %v1049
        %v1066 = vsel %vm1027, 0.0, %v1050
        %v1067 = vsel %vm1027, 0.0, %v1051
        %v1068 = vmul.f32 %v995, %v1060
        %v1069 = vmul.f32 %v996, %v1061
        %v1070 = vmul.f32 %v997, %v1062
        %v1071 = vmul.f32 %v998, %v1063
        %v1072 = vmul.f32 %v999, %v1064
        %v1073 = vmul.f32 %v1000, %v1065
        %v1074 = vmul.f32 %v1001, %v1066
        %v1075 = vmul.f32 %v1002, %v1067
        %v1076 = vadd.f32 %v1068, %v987
        %v1077 = vadd.f32 %v1069, %v988
        %v1078 = vadd.f32 %v1070, %v989
        %v1079 = vadd.f32 %v1071, %v990
        %v1080 = vadd.f32 %v1072, %v991
        %v1081 = vadd.f32 %v1073, %v992
        %v1082 = vadd.f32 %v1074, %v993
        %v1083 = vadd.f32 %v1075, %v994
        %v1084 = vmul.f32 %v995, %v1028
        %v1085 = vmul.f32 %v996, %v1029
        %v1086 = vmul.f32 %v997, %v1030
        %v1087 = vmul.f32 %v998, %v1031
        %v1088 = vmul.f32 %v999, %v1032
        %v1089 = vmul.f32 %v1000, %v1033
        %v1090 = vmul.f32 %v1001, %v1034
        %v1091 = vmul.f32 %v1002, %v1035
        %v1092 = vld [vmem:[#allocation2] sm:$0xff]
        %v1094 = vperm.slane %v1092, 0
        %v1095 = vperm.slane %v1092, 1
        %v1096 = vperm.slane %v1092, 2
        %v1097 = vperm.slane %v1092, 3
        %v1098 = vperm.slane %v1092, 4
        %v1099 = vperm.slane %v1092, 5
        %v1100 = vperm.slane %v1092, 6
        %v1101 = vperm.slane %v1092, 7
        %v1110 = vmul.f32 %v1084, %v1094
        %v1111 = vmul.f32 %v1085, %v1095
        %v1112 = vmul.f32 %v1086, %v1096
        %v1113 = vmul.f32 %v1087, %v1097
        %v1114 = vmul.f32 %v1088, %v1098
        %v1115 = vmul.f32 %v1089, %v1099
        %v1116 = vmul.f32 %v1090, %v1100
        %v1117 = vmul.f32 %v1091, %v1101
        %v1118 = vadd.f32 %v1110, %v1076
        %v1119 = vadd.f32 %v1111, %v1077
        %v1120 = vadd.f32 %v1112, %v1078
        %v1121 = vadd.f32 %v1113, %v1079
        %v1122 = vadd.f32 %v1114, %v1080
        %v1123 = vadd.f32 %v1115, %v1081
        %v1124 = vadd.f32 %v1116, %v1082
        %v1125 = vadd.f32 %v1117, %v1083
        %1134 = vst [vmem:[#allocation1] sm:$0xff] %v1118
        %1135 = vst [vmem:[#allocation1 + $0x9] sm:$0xff] %v1119
        %1136 = vst [vmem:[#allocation1 + $0x12] sm:$0xff] %v1120
        %1137 = vst [vmem:[#allocation1 + $0x1b] sm:$0xff] %v1121
        %1138 = vst [vmem:[#allocation1 + $0x24] sm:$0xff] %v1122
        %1139 = vst [vmem:[#allocation1 + $0x2d] sm:$0xff] %v1123
        %1140 = vst [vmem:[#allocation1 + $0x36] sm:$0xff] %v1124
        %1141 = vst [vmem:[#allocation1 + $0x3f] sm:$0xff] %v1125
        %s1142 = scalar_lea.vmem [#allocation1], 7
        %v1143 = vld [vmem:[%s1142] ss:$9 sm:$0xff]
        %1145 = vst [vmem:[#allocation2] sm:$0xff] %v1143
        %1146 = vrot.lane.b32.xlu0 %v1118, 64
        %v1147 = vpop.permute.xlu0 %1146
        %v1149 = vadd.f32 %v1118, %v1147
        %v1150 = vadd.f32 %v1149, %v1119
        %1151 = vrot.lane.b32.xlu0 %v1119, 64
        %v1152 = vpop.permute.xlu0 %1151
        %v1154 = vadd.f32 %v1150, %v1152
        %v1155 = vadd.f32 %v1154, %v1120
        %1156 = vrot.lane.b32.xlu0 %v1120, 64
        %v1157 = vpop.permute.xlu0 %1156
        %v1159 = vadd.f32 %v1155, %v1157
        %v1160 = vadd.f32 %v1159, %v1121
        %1161 = vrot.lane.b32.xlu0 %v1121, 64
        %v1162 = vpop.permute.xlu0 %1161
        %v1164 = vadd.f32 %v1160, %v1162
        %v1165 = vadd.f32 %v1164, %v1122
        %1166 = vrot.lane.b32.xlu0 %v1122, 64
        %v1167 = vpop.permute.xlu0 %1166
        %v1169 = vadd.f32 %v1165, %v1167
        %v1170 = vadd.f32 %v1169, %v1123
        %1171 = vrot.lane.b32.xlu0 %v1123, 64
        %v1172 = vpop.permute.xlu0 %1171
        %v1174 = vadd.f32 %v1170, %v1172
        %v1175 = vadd.f32 %v1174, %v1124
        %1176 = vrot.lane.b32.xlu0 %v1124, 64
        %v1177 = vpop.permute.xlu0 %1176
        %v1179 = vadd.f32 %v1175, %v1177
        %v1180 = vadd.f32 %v1179, %v1125
        %1181 = vrot.lane.b32.xlu0 %v1125, 64
        %v1182 = vpop.permute.xlu0 %1181
        %v1184 = vadd.f32 %v1180, %v1182
        %v1185 = vld [vmem:[%s8] sm:$0x1]
        %v1187 = vperm.slane %v1185, 0
        %v1189 = vmul.f32 %v583, %v1187
        %v1190 = vadd.f32 %v1184, %v1189
        %v1191 = vxor.u32 %v508, 2147483648
        %v1192 = vmul.f32 %v1191, 1.442695
        %v1193 = vpow.pop %v1192
        %v1194 = vadd.f32 %v1193, 1.0
        %v1195 = vrcp.pop %v1194
        %v1196 = vmul.f32 %v1194, %v1195
        %v1197 = vsub.f32 1.0, %v1196
        %v1198 = vmul.f32 %v1195, %v1197
        %v1199 = vadd.f32 %v1195, %v1198
        %vm1200 = vweird.f32 %v1194
        %vm1201 = vweird.f32 %v1195
        %vm1202 = vmor %vm1200, %vm1201
        %v1203 = vsel %vm1202, %v1195, %v1199
        %v1204 = vand.u32 2147483647, %v1194
        %vm1205 = vcmp.eq.f32.partialorder %v1204, 8.507059e+37
        %v1206 = vand.u32 %v1194, 2147483648
        %v1207 = vor.u32 1.1754944e-38, %v1206
        %v1208 = vsel %vm1205, %v1207, %v1203
        %v1209 = vmul.f32 1.0, %v1208
        %v1210 = vmul.f32 %v508, %v1209
        %1212 = vrot.lane.b32.xlu0 %v1210, 64
        %v1213 = vpop.permute.xlu0 %1212
        %v1215 = vmul.f32 %v1190, %v1213
        %v1216 = vpack.c.bf16 %v1215, %v1215
        %v1217 = vld [vmem:[%s9] sm:$0xf]
        %v1218 = vld [vmem:[%s9 + $0x4] sm:$0xf]
        %v1219 = vld [vmem:[%s9 + $0x8] sm:$0xf]
        %v1220 = vld [vmem:[%s9 + $0xc] sm:$0xf]
        %v1221 = vld [vmem:[%s9 + $0x10] sm:$0xf]
        %v1222 = vld [vmem:[%s9 + $0x14] sm:$0xf]
        %v1223 = vld [vmem:[%s9 + $0x18] sm:$0xf]
        %v1224 = vld [vmem:[%s9 + $0x1c] sm:$0xf]
        %v1233 = vunpack.c.l.b16 %v1217
        %v1234 = vunpack.c.l.b16 %v1218
        %v1235 = vunpack.c.l.b16 %v1219
        %v1236 = vunpack.c.l.b16 %v1220
        %v1237 = vunpack.c.l.b16 %v1221
        %v1238 = vunpack.c.l.b16 %v1222
        %v1239 = vunpack.c.l.b16 %v1223
        %v1240 = vunpack.c.l.b16 %v1224
        %v1241 = vpack.c.b16 %v1234, %v1233
        %v1242 = vpack.c.b16 %v1236, %v1235
        %v1243 = vpack.c.b16 %v1238, %v1237
        %v1244 = vpack.c.b16 %v1240, %v1239
        %v1250 = vsel %vm617, %v1216, 0
        %1252 = vmatpush.bf16.msra.mxu0 0
        %1253 = vmatpush.bf16.msra.mxu0 0
        %1254 = vmatpush.bf16.msra.mxu0 0
        %1255 = vmatpush.bf16.msra.mxu0 0
        %1256 = vmatpush.bf16.msra.mxu0 %v1244
        %1257 = vmatpush.bf16.msra.mxu0 %v1243
        %1258 = vmatpush.bf16.msra.mxu0 %v1242
        %1259 = vmatpush.bf16.msra.mxu0 %v1241
        %1260 = vmatmul.bf16.gmra.mxu0 %v1250
        %v1261 = vpop.f32.mrf.mxu0
        %v1262 = vadd.f32 0.0, %v1261
        %v1263 = vpop.f32.mrf.mxu0
        %1264 = vdwg.mxu0
        %v1265 = vadd.f32 %v447, %v1262
        %v1266 = vpack.c.bf16 %v1265, %v1265
        %vm1267 = vcmask 257024
        %1268 = vst.msk [vmem:[%s437] sm:$0xf] %vm1267, %v1266
        %s1269 = sand.u32 %s268, 1
        %s1270 = scalar_lea.sflag [#allocation6], %s1269
        %s1271 = sand.u32 %s268, 1
        %s1272 = smul.addr %s1271, 4
        %s1273 = scalar_lea.vmem [#allocation12], %s1272
        // Predicated region
        $region81: #{tpu_custom_call.1} parent=59 // pred_check
          %p1274 = pneg %p278
        $region82: #{tpu_custom_call.1} parent=59 // pred_check_branch
          %1276 = sbr.rel (%p1274) target = $region84
        $region83: #{tpu_custom_call.1} parent=59 // pred_region
          %1278 = vsyncadd %s1270, 0
          %s1279 = sadd.s32 %s34, %s33
          %s1280 = smul.addr %s1279, 4
          %s1281 = scalar_lea.hbm %s10, %s1280
          %s1283 = sshll.u32 %s1273, 4
          %s1284 = int_to_ptr.vmem [resolvable:$true] %s1283
          %s1285 = sshll.u32 %s1281, 4
          %s1286 = int_to_ptr.hbm [resolvable:$true] %s1285
          %1288 = dma.vmem_to_hbm [thread:$0]  %s1284, 64, %s1286, %s1270
        $region84: #{tpu_custom_call.1} parent=59 // pred_fallthru
          _
      $region60: #{tpu_custom_call.1} parent=5 // pred_fallthru
        _
      %p1289 = scmp.le.s32.totalorder 2, %s24
      // Predicated region
      $region85: #{tpu_custom_call.1} parent=5 // pred_check
        %p1290 = pneg %p1289
      $region86: #{tpu_custom_call.1} parent=5 // pred_check_branch
        %1292 = sbr.rel (%p1290) target = $region88
      $region87: #{tpu_custom_call.1} parent=5 // pred_region
        %s1293 = ssub.s32 %s24, 2
        // Predicated region
        $region89: #{tpu_custom_call.1} parent=87 // pred_check
          %p1294 = pneg %p284
        $region90: #{tpu_custom_call.1} parent=87 // pred_check_branch
          %1296 = sbr.rel (%p1294) target = $region92
        $region91: #{tpu_custom_call.1} parent=87 // pred_region
          %s1297 = sand.u32 %s269, 1
          %s1298 = scalar_lea.sflag [#allocation6], %s1297
          %s1299 = sand.u32 %s269, 1
          %s1300 = smul.addr %s1299, 4
          %s1301 = scalar_lea.vmem [#allocation12], %s1300
          %1303 = dma.done %s1298, 64
        $region92: #{tpu_custom_call.1} parent=87 // pred_fallthru
          _
      $region88: #{tpu_custom_call.1} parent=5 // pred_fallthru
        _
    $region6: #{tpu_custom_call.1} parent=1 // loop_footer
      %s28 = sadd.s32 1, %s24
    $region7: #{tpu_custom_call.1} parent=1 // loop_footer_branch
      %23 = sbr.rel target = $region3
    $region8: #{tpu_custom_call.1} parent=1 // loop_exit
      _
    %1304 = vsyncpa [#allocation5], 1
    %s1305 = scalar_lea.sflag [#allocation5], 1
    %1306 = vsyncpa %s1305, 1
    %1307 = vsyncpa [#allocation8], 1
    %1308 = vsyncpa [#allocation11], 1
    %1309 = vsyncpa [#allocation6], 1
    %s1310 = scalar_lea.sflag [#allocation6], 1
    %1311 = vsyncpa %s1310, 1

</llo_original>
